<compile_context>
chip_gen: v6e
topology: v6e:2x2x1
jax: 0.10.0
libtpu: 0.0.40
codegen_flags: <defaults>
</compile_context>

<pallas_src>
import jax
import jax.numpy as jnp
import numpy as np
from jax.experimental import pallas as pl
from jax.experimental.pallas import tpu as pltpu

# ---------------- problem sizes (small, consistent with the module) ----------------
B = 2          # batch
CIN = 8        # in_channels
COUT = 16      # out_channels
L = 128        # sequence length (lane-aligned)
TDIM = 32      # time_dim
CDIM = 16      # condition_dim
D_TC = TDIM + CDIM          # 48
D_TCP = D_TC + 8            # packed time/cond rows; row D_TC is the constant-1 (bias) row

G1 = CIN // 4                 # norm1 groups
G2 = max(COUT // 4, 1)        # norm2 groups (over 2*COUT channels)
G3 = max(COUT // 4, 1)        # norm3 groups
EPS = 1e-5
FP = 8                        # padded segment ("fold") lane width for the stats matmuls


# ---------------------------- packed slab layout ----------------------------
def _slab_blocks(LT):
    return [
        ("w1r", 2 * COUT, 4 * CIN + 8),    # [conv1 taps | res 1x1 | bias col]
        ("w2s", COUT, 6 * COUT + 8),       # conv2 taps stacked + bias col
        ("w3s", COUT, 3 * COUT + 8),       # conv3 taps stacked + bias col
        ("wfc", 3 * COUT, D_TCP),          # [time_scale; time_shift; cond_layer] + bias col
        ("p1", CIN, CIN),                  # group-mean pool matrices (1/(gs*L) within group)
        ("p2", 2 * COUT, 2 * COUT),
        ("p3", COUT, COUT),
        ("gb1", CIN, 2 * FP),              # [gamma tiled x8 | beta tiled x8]
        ("gb2", 2 * COUT, 2 * FP),
        ("gb3", COUT, 2 * FP),
        ("one8", 8, LT),                   # row 0 = 1.0 (carries biases into conv matmuls)
        ("exp", FP, LT),                   # segment -> lane one-hot (expand)
        ("seg", LT, FP),                   # lane -> segment ones (reduce)
    ]


def slab_layout(fold, seq):
    LT = fold * seq
    cols = max(128, LT)
    off, r = {}, 0
    for name, nr, nc in _slab_blocks(LT):
        assert nc <= cols
        off[name] = r
        r += ((nr + 7) // 8) * 8
    return off, r, cols


def _pool_matrix(C, groups, seg_len):
    gs = C // groups
    gid = np.arange(C) // gs
    return (gid[:, None] == gid[None, :]).astype(np.float32) / float(gs * seg_len)


def pack_params(P, fold, seq):
    """Pack all module parameters + layout matrices into one f32 slab (host-side, one time)."""
    off, rows, cols = slab_layout(fold, seq)
    LT = fold * seq
    m = np.zeros((rows, cols), np.float32)

    def put(name, mat):
        mat = np.asarray(mat, np.float32)
        r = off[name]
        m[r:r + mat.shape[0], :mat.shape[1]] = mat

    # conv1 taps + residual 1x1; biases in column 4*CIN (picked up by the ones8 RHS rows)
    w1 = np.asarray(P['w1'], np.float32)                       # (3, COUT, CIN), tap-major
    blk = np.zeros((2 * COUT, 4 * CIN + 8), np.float32)
    blk[:COUT, 0 * CIN:1 * CIN] = w1[0]
    blk[:COUT, 1 * CIN:2 * CIN] = w1[1]
    blk[:COUT, 2 * CIN:3 * CIN] = w1[2]
    blk[COUT:, 3 * CIN:4 * CIN] = np.asarray(P['wres'], np.float32)
    blk[:COUT, 4 * CIN] = np.asarray(P['cb1'], np.float32).reshape(-1)
    blk[COUT:, 4 * CIN] = np.asarray(P['bres'], np.float32).reshape(-1)
    put("w1r", blk)

    w2 = np.asarray(P['w2'], np.float32)
    blk = np.zeros((COUT, 6 * COUT + 8), np.float32)
    blk[:, 0:2 * COUT] = w2[0]
    blk[:, 2 * COUT:4 * COUT] = w2[1]
    blk[:, 4 * COUT:6 * COUT] = w2[2]
    blk[:, 6 * COUT] = np.asarray(P['cb2'], np.float32).reshape(-1)
    put("w2s", blk)

    w3 = np.asarray(P['w3'], np.float32)
    blk = np.zeros((COUT, 3 * COUT + 8), np.float32)
    blk[:, 0:COUT] = w3[0]
    blk[:, COUT:2 * COUT] = w3[1]
    blk[:, 2 * COUT:3 * COUT] = w3[2]
    blk[:, 3 * COUT] = np.asarray(P['cb3'], np.float32).reshape(-1)
    put("w3s", blk)

    # fused [time_scale; time_shift; cond_layer]; biases in column D_TC (matched by the ones
    # row the wrapper appends to the pre-expanded swish([t_emb; cond]) input)
    blk = np.zeros((3 * COUT, D_TCP), np.float32)
    blk[:COUT, :TDIM] = np.asarray(P['wts'], np.float32)
    blk[COUT:2 * COUT, :TDIM] = np.asarray(P['wsh'], np.float32)
    blk[2 * COUT:, TDIM:TDIM + CDIM] = np.asarray(P['wc'], np.float32)
    blk[:COUT, D_TC] = np.asarray(P['bts'], np.float32).reshape(-1)
    blk[COUT:2 * COUT, D_TC] = np.asarray(P['bsh'], np.float32).reshape(-1)
    blk[2 * COUT:, D_TC] = np.asarray(P['bc'], np.float32).reshape(-1)
    put("wfc", blk)

    put("p1", _pool_matrix(CIN, G1, seq))
    put("p2", _pool_matrix(2 * COUT, G2, seq))
    put("p3", _pool_matrix(COUT, G3, seq))

    def put_gb(name, g, b):
        g = np.asarray(g, np.float32).reshape(-1, 1)
        b = np.asarray(b, np.float32).reshape(-1, 1)
        put(name, np.concatenate([np.tile(g, (1, FP)), np.tile(b, (1, FP))], axis=1))

    put_gb("gb1", P['g1'], P['be1'])
    put_gb("gb2", P['g2'], P['be2'])
    put_gb("gb3", P['g3'], P['be3'])

    one8 = np.zeros((8, LT), np.float32)
    one8[0, :] = 1.0
    put("one8", one8)

    segid = np.arange(LT) // seq
    expm = np.zeros((FP, LT), np.float32)
    expm[segid, np.arange(LT)] = 1.0
    put("exp", expm)
    segm = np.zeros((LT, FP), np.float32)
    segm[np.arange(LT), segid] = 1.0
    put("seg", segm)

    return jnp.asarray(m)


# ---------------------------- the fused kernel ----------------------------
def make_kernel(fold, seq, off):
    LT = fold * seq

    def kernel(x_ref, tc_ref, m_ref, out_ref):
        f32 = jnp.float32

        def mget(name, nr, nc):
            return m_ref[pl.ds(off[name], nr), pl.ds(0, nc)]

        x = x_ref[0]                       # (CIN, LT)
        tce = tc_ref[0]                    # (D_TCP, LT): swish([t_emb; cond]) pre-expanded + ones row

        S = mget("seg", LT, FP)            # (LT, 8)  lane -> segment ones (segment lane-sums via MXU)
        E = mget("exp", FP, LT)            # (8, LT)  segment -> lane one-hot (expand via MXU)
        ones8 = mget("one8", 8, LT)        # row 0 = 1 (bias carrier for the conv matmuls)

        lane = jax.lax.broadcasted_iota(jnp.int32, (1, LT), 1)
        pos = lane % seq
        first = pos == 0
        last = pos == (seq - 1)

        def swish(v):
            return v * jax.nn.sigmoid(v)

        def shifted(y):
            ym1 = jnp.where(first, 0.0, pltpu.roll(y, shift=1, axis=1))
            yp1 = jnp.where(last, 0.0, pltpu.roll(y, shift=LT - 1, axis=1))
            return ym1, yp1

        def gnorm(y, gb_name, pool_name):
            # all statistics / pooling / broadcasting on the MXU; fused affine on the VPU
            C = y.shape[0]
            sy = jnp.dot(y, S, preferred_element_type=f32)           # (C, 8) per-segment sums
            sy2 = jnp.dot(y * y, S, preferred_element_type=f32)      # (C, 8) per-segment sum-of-squares
            st = jnp.dot(mget(pool_name, C, C),
                         jnp.concatenate([sy, sy2], axis=1),
                         preferred_element_type=f32)                 # (C, 16) = [mean | E[y^2]]
            mean = st[:, :FP]
            rstd = jax.lax.rsqrt(st[:, FP:] - mean * mean + EPS)
            gb = mget(gb_name, C, 2 * FP)                            # [gamma x8 | beta x8]
            a = rstd * gb[:, :FP]
            b = gb[:, FP:] - mean * a
            ab = jnp.dot(jnp.concatenate([a, b], axis=0), E,
                         preferred_element_type=f32)                 # (2C, LT)
            return y * ab[:C] + ab[C:]

        # fused time_scale / time_shift / cond_layer (+ biases) in one matmul
        fcf = jnp.dot(mget("wfc", 3 * COUT, D_TCP), tce,
                      preferred_element_type=f32)                    # (3*COUT, LT)
        scale = fcf[:COUT] + 1.0
        shift = fcf[COUT:2 * COUT]
        cvec = fcf[2 * COUT:]

        # stage 1: conv1(swish(norm1(x))) fused with the 1x1 residual conv (+ biases via ones8)
        y = swish(gnorm(x, "gb1", "p1"))
        ym1, yp1 = shifted(y)
        r = jnp.dot(mget("w1r", 2 * COUT, 4 * CIN + 8),
                    jnp.concatenate([ym1, y, yp1, x, ones8], axis=0),
                    preferred_element_type=f32)                      # (2*COUT, LT)
        y = r[:COUT]
        res = r[COUT:]

        # stage 2: channel-concat cond, norm2, swish, conv2 (single stacked matmul)
        y = jnp.concatenate([y, cvec], axis=0)                       # (2*COUT, LT)
        y = swish(gnorm(y, "gb2", "p2"))
        ym1, yp1 = shifted(y)
        y = jnp.dot(mget("w2s", COUT, 6 * COUT + 8),
                    jnp.concatenate([ym1, y, yp1, ones8], axis=0),
                    preferred_element_type=f32)                      # (COUT, LT)

        # FiLM from time embedding
        y = y * scale + shift

        # stage 3: norm3, swish, dropout (eval), conv3
        y = swish(gnorm(y, "gb3", "p3"))
        # TODO(synk): Dropout(0.1) kept as identity (eval mode); train-mode PRNG masking omitted.
        ym1, yp1 = shifted(y)
        y = jnp.dot(mget("w3s", COUT, 3 * COUT + 8),
                    jnp.concatenate([ym1, y, yp1, ones8], axis=0),
                    preferred_element_type=f32)                      # (COUT, LT)

        out_ref[0] = y + res
        # Note: has_attention=False path (default) — AttentionBlock not instantiated.

    return kernel


# ---------------------------- wrapper ----------------------------
def _fold_batch(a, fold):
    # (B, C, L) -> (B//fold, C, fold*L); batch g*fold+b occupies lanes [b*L, (b+1)*L)
    if fold == 1:
        return a
    Bn, C, Ln = a.shape
    a = a.transpose(1, 0, 2).reshape(C, Bn // fold, fold * Ln)
    return a.transpose(1, 0, 2)


def _unfold_batch(a, fold, Ln):
    if fold == 1:
        return a
    G, C, _ = a.shape
    a = a.reshape(G, C, fold, Ln).transpose(0, 2, 1, 3)
    return a.reshape(G * fold, C, Ln)


def resconv_block(x, t_emb, cond, mslab, fold):
    """x: (B, CIN, L), t_emb: (B, TDIM), cond: (B, CDIM). Returns (B, COUT, L)."""
    Bn, _, Ln = x.shape
    assert Bn % fold == 0, "fold must divide the batch"
    grid = Bn // fold
    LT = fold * Ln
    off, rows, cols = slab_layout(fold, Ln)
    assert mslab.shape == (rows, cols), "parameter slab was packed for a different fold/seq"

    xf = _fold_batch(x, fold)                                       # (grid, CIN, LT)

    # swish(time/cond) + constant-1 bias row, pre-expanded to the lane axis (tiny, done in XLA)
    tc = jnp.concatenate([t_emb, cond], axis=1)                     # (B, D_TC)
    tc = tc * jax.nn.sigmoid(tc)
    tc = jnp.concatenate(
        [tc, jnp.ones((Bn, 1), jnp.float32),
         jnp.zeros((Bn, D_TCP - D_TC - 1), jnp.float32)], axis=1)   # (B, D_TCP)
    tce = tc.reshape(grid, fold, D_TCP).transpose(0, 2, 1)          # (grid, D_TCP, fold)
    tce = jnp.repeat(tce, Ln, axis=2)                               # (grid, D_TCP, LT)

    out = pl.pallas_call(
        make_kernel(fold, Ln, off),
        out_shape=jax.ShapeDtypeStruct((grid, COUT, LT), jnp.float32),
        grid_spec=pltpu.PrefetchScalarGridSpec(
            num_scalar_prefetch=0,
            grid=(grid,),
            in_specs=[
                pl.BlockSpec((1, CIN, LT), lambda i: (i, 0, 0)),
                pl.BlockSpec((1, D_TCP, LT), lambda i: (i, 0, 0)),
                pl.BlockSpec((rows, cols), lambda i: (0, 0)),
            ],
            out_specs=pl.BlockSpec((1, COUT, LT), lambda i: (i, 0, 0)),
        ),
        compiler_params=pltpu.CompilerParams(
            dimension_semantics=("parallel",)),
    )(xf, tce, mslab)

    return _unfold_batch(out, fold, Ln)


def infer_fold(batch, seq):
    """Generation-aware batch folding into the lane axis.

    Single-TensorCore chips (v5e / v6e): fold the whole batch into one fat step.
    Multi-TC chips (v7x, v4/v5p megacore, unknown): one >=seq-lane step per TensorCore
    (grid sharded via dimension_semantics=("parallel",)).
    """
    try:
        kind = jax.devices()[0].device_kind.lower()
    except Exception:
        kind = ""
    single_tc = any(t in kind for t in
                    ("v5e", "v5 lite", "v5lite", "v6e", "v6 lite", "v6lite"))
    target = batch if single_tc else max(1, batch // 2)
    cap = max(1, 2048 // seq)          # keep per-step lane width in the 128..2048 sweet spot
    fold = max(1, min(target, cap))
    while batch % fold:
        fold -= 1
    return fold


# ---------------------------- pure-JAX reference ----------------------------
def reference(x, t_emb, cond, P):
    def sw(v):
        return v * jax.nn.sigmoid(v)

    def gn(y, g, b, groups):
        Bn, C, Ln = y.shape
        yg = y.reshape(Bn, groups, (C // groups) * Ln)
        m = yg.mean(-1, keepdims=True)
        v = ((yg - m) ** 2).mean(-1, keepdims=True)
        yn = ((yg - m) / jnp.sqrt(v + EPS)).reshape(Bn, C, Ln)
        return yn * g.reshape(1, C, 1) + b.reshape(1, C, 1)

    def conv(y, w, bb):
        Bn, C, Ln = y.shape
        yp = jnp.pad(y, ((0, 0), (0, 0), (1, 1)))
        out = (jnp.einsum('oc,bcl->bol', w[0], yp[:, :, 0:Ln])
               + jnp.einsum('oc,bcl->bol', w[1], yp[:, :, 1:Ln + 1])
               + jnp.einsum('oc,bcl->bol', w[2], yp[:, :, 2:Ln + 2]))
        return out + bb.reshape(1, -1, 1)

    y = conv(sw(gn(x, P['g1'], P['be1'], G1)), P['w1'], P['cb1'])
    cvec = jnp.einsum('oc,bc->bo', P['wc'], sw(cond)) + P['bc'].reshape(1, -1)
    c_rep = jnp.broadcast_to(cvec[:, :, None], (B, COUT, L))
    y = jnp.concatenate([y, c_rep], axis=1)
    y = conv(sw(gn(y, P['g2'], P['be2'], G2)), P['w2'], P['cb2'])
    st = sw(t_emb)
    scale = jnp.einsum('od,bd->bo', P['wts'], st) + P['bts'].reshape(1, -1) + 1.0
    shift = jnp.einsum('od,bd->bo', P['wsh'], st) + P['bsh'].reshape(1, -1)
    y = y * scale[:, :, None] + shift[:, :, None]
    y = conv(sw(gn(y, P['g3'], P['be3'], G3)), P['w3'], P['cb3'])
    res = jnp.einsum('oc,bcl->bol', P['wres'], x) + P['bres'].reshape(1, -1, 1)
    return y + res


# ---------------------------- main ----------------------------
if __name__ == "__main__":
    key = jax.random.PRNGKey(0)
    ks = jax.random.split(key, 32)

    def nrm(k, shape, s=0.1):
        return (s * jax.random.normal(k, shape)).astype(jnp.float32)

    P = {
        'g1': 1.0 + nrm(ks[0], (CIN, 1)),       'be1': nrm(ks[1], (CIN, 1)),
        'g2': 1.0 + nrm(ks[2], (2 * COUT, 1)),  'be2': nrm(ks[3], (2 * COUT, 1)),
        'g3': 1.0 + nrm(ks[4], (COUT, 1)),      'be3': nrm(ks[5], (COUT, 1)),
        # conv weights stored as (kernel_tap, Cout, Cin)  (= torch (Cout,Cin,3) transposed)
        'w1': nrm(ks[6], (3, COUT, CIN)),        'cb1': nrm(ks[7], (COUT, 1)),
        'w2': nrm(ks[8], (3, COUT, 2 * COUT)),   'cb2': nrm(ks[9], (COUT, 1)),
        'w3': nrm(ks[10], (3, COUT, COUT)),      'cb3': nrm(ks[11], (COUT, 1)),
        'wres': nrm(ks[12], (COUT, CIN)),        'bres': nrm(ks[13], (COUT, 1)),
        'wts': nrm(ks[14], (COUT, TDIM)),        'bts': nrm(ks[15], (COUT, 1)),
        'wsh': nrm(ks[16], (COUT, TDIM)),        'bsh': nrm(ks[17], (COUT, 1)),
        'wc':  nrm(ks[18], (COUT, CDIM)),        'bc':  nrm(ks[19], (COUT, 1)),
    }

    x = jax.random.normal(ks[20], (B, CIN, L), dtype=jnp.float32)
    t_emb = jax.random.normal(ks[21], (B, TDIM), dtype=jnp.float32)
    cond = jax.random.normal(ks[22], (B, CDIM), dtype=jnp.float32)

    FOLD = infer_fold(B, L)
    mslab = pack_params(P, FOLD, L)

    fwd = jax.jit(resconv_block, static_argnames=("fold",))
    out = jax.block_until_ready(fwd(x, t_emb, cond, mslab, fold=FOLD))
    ref = jax.block_until_ready(reference(x, t_emb, cond, P))

    assert out.shape == (B, COUT, L)
    assert np.allclose(np.asarray(out), np.asarray(ref), atol=1e-2, rtol=1e-2), \
        "Pallas kernel output mismatch vs JAX reference"
    print("KERNEL_OK")
</pallas_src>

<mosaic_0001>
module attributes {stable_mosaic.version = 11 : i64} {
  func.func @kernel(%arg0: i32, %arg1: memref<1x8x128xf32, #tpu.memory_space<vmem>>, %arg2: memref<1x56x128xf32, #tpu.memory_space<vmem>>, %arg3: memref<368x128xf32, #tpu.memory_space<vmem>>, %arg4: memref<1x16x128xf32, #tpu.memory_space<vmem>>) attributes {dimension_semantics = [#tpu.dimension_semantics<parallel>], iteration_bounds = array<i64: 2>, scalar_prefetch = 0 : i64, scratch_operands = 0 : i64, tpu.core_type = #tpu.core_type<tc>, window_params = [{transform_indices = @transform_0, window_bounds = array<i64: 1, 8, 128>}, {transform_indices = @transform_1, window_bounds = array<i64: 1, 56, 128>}, {pipeline_mode = #tpu.pipeline_mode<synchronous>, transform_indices = @transform_2, window_bounds = array<i64: 368, 128>}, {transform_indices = @transform_3, window_bounds = array<i64: 1, 16, 128>}]} {
    %c0 = arith.constant 0 : index
    %c0_0 = arith.constant 0 : index
    %c0_1 = arith.constant 0 : index
    %0 = vector.load %arg1[%c0, %c0_0, %c0_1] : memref<1x8x128xf32, #tpu.memory_space<vmem>>, vector<1x8x128xf32>
    %1 = vector.shape_cast %0 : vector<1x8x128xf32> to vector<8x128xf32>
    %c0_2 = arith.constant 0 : index
    %c0_3 = arith.constant 0 : index
    %c0_4 = arith.constant 0 : index
    %2 = vector.load %arg2[%c0_2, %c0_3, %c0_4] : memref<1x56x128xf32, #tpu.memory_space<vmem>>, vector<1x56x128xf32>
    %3 = vector.shape_cast %2 : vector<1x56x128xf32> to vector<56x128xf32>
    %c240 = arith.constant 240 : index
    %c0_5 = arith.constant 0 : index
    %4 = vector.load %arg3[%c240, %c0_5] : memref<368x128xf32, #tpu.memory_space<vmem>>, vector<128x8xf32>
    %c232 = arith.constant 232 : index
    %c0_6 = arith.constant 0 : index
    %5 = vector.load %arg3[%c232, %c0_6] : memref<368x128xf32, #tpu.memory_space<vmem>>, vector<8x128xf32>
    %c224 = arith.constant 224 : index
    %c0_7 = arith.constant 0 : index
    %6 = vector.load %arg3[%c224, %c0_7] : memref<368x128xf32, #tpu.memory_space<vmem>>, vector<8x128xf32>
    %7 = tpu.iota {dimensions = array<i32: 1>} : vector<1x128xi32>
    %c128_i32 = arith.constant 128 : i32
    %c0_i32 = arith.constant 0 : i32
    %8 = arith.cmpi eq, %c128_i32, %c0_i32 : i32
    %c1_i32 = arith.constant 1 : i32
    %9 = arith.select %8, %c1_i32, %c128_i32 : i32
    %10 = vector.broadcast %9 : i32 to vector<1x128xi32>
    %11 = arith.remsi %7, %10 : vector<1x128xi32>
    %c0_i32_8 = arith.constant 0 : i32
    %12 = vector.broadcast %c0_i32_8 : i32 to vector<1x128xi32>
    %13 = arith.cmpi ne, %11, %12 : vector<1x128xi32>
    %c0_i32_9 = arith.constant 0 : i32
    %14 = vector.broadcast %c0_i32_9 : i32 to vector<1x128xi32>
    %15 = arith.cmpi slt, %11, %14 : vector<1x128xi32>
    %c0_i32_10 = arith.constant 0 : i32
    %16 = arith.cmpi slt, %9, %c0_i32_10 : i32
    %17 = vector.broadcast %16 : i1 to vector<1x128xi1>
    %18 = vector.broadcast %17 : vector<1x128xi1> to vector<1x128xi1>
    %19 = arith.xori %15, %18 : vector<1x128xi1>
    %20 = arith.andi %19, %13 : vector<1x128xi1>
    %21 = vector.broadcast %9 : i32 to vector<1x128xi32>
    %22 = arith.addi %11, %21 : vector<1x128xi32>
    %23 = arith.select %20, %22, %11 : vector<1x128xi1>, vector<1x128xi32>
    %c0_i32_11 = arith.constant 0 : i32
    %24 = vector.broadcast %c0_i32_11 : i32 to vector<1x128xi32>
    %25 = arith.cmpi eq, %23, %24 : vector<1x128xi32>
    %c127_i32 = arith.constant 127 : i32
    %26 = vector.broadcast %c127_i32 : i32 to vector<1x128xi32>
    %27 = arith.cmpi eq, %23, %26 : vector<1x128xi32>
    %c64 = arith.constant 64 : index
    %c0_12 = arith.constant 0 : index
    %28 = vector.load %arg3[%c64, %c0_12] : memref<368x128xf32, #tpu.memory_space<vmem>>, vector<48x56xf32>
    %cst = arith.constant dense<0.000000e+00> : vector<48x128xf32>
    %29 = tpu.matmul %28, %3, %cst {dimension_numbers = #tpu.dot_dimension_numbers<[1], [0], [0], [1], [0, 0, 1, 1], [], []>} : vector<48x56xf32>, vector<56x128xf32>, vector<48x128xf32> -> vector<48x128xf32>
    %30 = vector.extract_strided_slice %29 {offsets = [0, 0], sizes = [16, 128], strides = [1, 1]} : vector<48x128xf32> to vector<16x128xf32>
    %cst_13 = arith.constant 1.000000e+00 : f32
    %31 = vector.broadcast %cst_13 : f32 to vector<16x128xf32>
    %32 = arith.addf %30, %31 : vector<16x128xf32>
    %33 = vector.extract_strided_slice %29 {offsets = [16, 0], sizes = [16, 128], strides = [1, 1]} : vector<48x128xf32> to vector<16x128xf32>
    %34 = vector.extract_strided_slice %29 {offsets = [32, 0], sizes = [16, 128], strides = [1, 1]} : vector<48x128xf32> to vector<16x128xf32>
    %cst_14 = arith.constant dense<0.000000e+00> : vector<8x8xf32>
    %35 = tpu.matmul %1, %4, %cst_14 {dimension_numbers = #tpu.dot_dimension_numbers<[1], [0], [0], [1], [0, 0, 1, 1], [], []>} : vector<8x128xf32>, vector<128x8xf32>, vector<8x8xf32> -> vector<8x8xf32>
    %36 = arith.mulf %1, %1 : vector<8x128xf32>
    %cst_15 = arith.constant dense<0.000000e+00> : vector<8x8xf32>
    %37 = tpu.matmul %36, %4, %cst_15 {dimension_numbers = #tpu.dot_dimension_numbers<[1], [0], [0], [1], [0, 0, 1, 1], [], []>} : vector<8x128xf32>, vector<128x8xf32>, vector<8x8xf32> -> vector<8x8xf32>
    %c112 = arith.constant 112 : index
    %c0_16 = arith.constant 0 : index
    %38 = vector.load %arg3[%c112, %c0_16] : memref<368x128xf32, #tpu.memory_space<vmem>>, vector<8x8xf32>
    %39 = tpu.concatenate %35, %37 in 1 : vector<8x8xf32>, vector<8x8xf32> -> vector<8x16xf32>
    %cst_17 = arith.constant dense<0.000000e+00> : vector<8x16xf32>
    %40 = tpu.matmul %38, %39, %cst_17 {dimension_numbers = #tpu.dot_dimension_numbers<[1], [0], [0], [1], [0, 0, 1, 1], [], []>} : vector<8x8xf32>, vector<8x16xf32>, vector<8x16xf32> -> vector<8x16xf32>
    %41 = vector.extract_strided_slice %40 {offsets = [0, 0], sizes = [8, 8], strides = [1, 1]} : vector<8x16xf32> to vector<8x8xf32>
    %42 = vector.extract_strided_slice %40 {offsets = [0, 8], sizes = [8, 8], strides = [1, 1]} : vector<8x16xf32> to vector<8x8xf32>
    %43 = arith.mulf %41, %41 : vector<8x8xf32>
    %44 = arith.subf %42, %43 : vector<8x8xf32>
    %cst_18 = arith.constant 9.99999974E-6 : f32
    %45 = vector.broadcast %cst_18 : f32 to vector<8x8xf32>
    %46 = arith.addf %44, %45 : vector<8x8xf32>
    %47 = math.rsqrt %46 : vector<8x8xf32>
    %c168 = arith.constant 168 : index
    %c0_19 = arith.constant 0 : index
    %48 = vector.load %arg3[%c168, %c0_19] : memref<368x128xf32, #tpu.memory_space<vmem>>, vector<8x16xf32>
    %49 = vector.extract_strided_slice %48 {offsets = [0, 0], sizes = [8, 8], strides = [1, 1]} : vector<8x16xf32> to vector<8x8xf32>
    %50 = arith.mulf %47, %49 : vector<8x8xf32>
    %51 = vector.extract_strided_slice %48 {offsets = [0, 8], sizes = [8, 8], strides = [1, 1]} : vector<8x16xf32> to vector<8x8xf32>
    %52 = arith.mulf %41, %50 : vector<8x8xf32>
    %53 = arith.subf %51, %52 : vector<8x8xf32>
    %54 = tpu.concatenate %50, %53 in 0 : vector<8x8xf32>, vector<8x8xf32> -> vector<16x8xf32>
    %cst_20 = arith.constant dense<0.000000e+00> : vector<16x128xf32>
    %55 = tpu.matmul %54, %5, %cst_20 {dimension_numbers = #tpu.dot_dimension_numbers<[1], [0], [0], [1], [0, 0, 1, 1], [], []>} : vector<16x8xf32>, vector<8x128xf32>, vector<16x128xf32> -> vector<16x128xf32>
    %56 = vector.extract_strided_slice %55 {offsets = [0, 0], sizes = [8, 128], strides = [1, 1]} : vector<16x128xf32> to vector<8x128xf32>
    %57 = arith.mulf %1, %56 : vector<8x128xf32>
    %58 = vector.extract_strided_slice %55 {offsets = [8, 0], sizes = [8, 128], strides = [1, 1]} : vector<16x128xf32> to vector<8x128xf32>
    %59 = arith.addf %57, %58 : vector<8x128xf32>
    %60 = arith.negf %59 : vector<8x128xf32>
    %61 = math.exp %60 : vector<8x128xf32>
    %cst_21 = arith.constant 1.000000e+00 : f32
    %62 = vector.broadcast %cst_21 : f32 to vector<8x128xf32>
    %63 = arith.addf %62, %61 : vector<8x128xf32>
    %64 = arith.divf %62, %63 : vector<8x128xf32>
    %65 = arith.mulf %59, %64 : vector<8x128xf32>
    %c1_i32_22 = arith.constant 1 : i32
    %66 = tpu.dynamic_rotate %65 by %c1_i32_22 dim 1 : vector<8x128xf32>, i32 -> vector<8x128xf32>
    %cst_23 = arith.constant 0.000000e+00 : f32
    %67 = vector.shape_cast %25 : vector<1x128xi1> to vector<1x128xi1>
    %68 = vector.broadcast %67 : vector<1x128xi1> to vector<8x128xi1>
    %69 = vector.broadcast %cst_23 : f32 to vector<8x128xf32>
    %70 = arith.select %68, %69, %66 : vector<8x128xi1>, vector<8x128xf32>
    %c127_i32_24 = arith.constant 127 : i32
    %71 = tpu.dynamic_rotate %65 by %c127_i32_24 dim 1 : vector<8x128xf32>, i32 -> vector<8x128xf32>
    %cst_25 = arith.constant 0.000000e+00 : f32
    %72 = vector.shape_cast %27 : vector<1x128xi1> to vector<1x128xi1>
    %73 = vector.broadcast %72 : vector<1x128xi1> to vector<8x128xi1>
    %74 = vector.broadcast %cst_25 : f32 to vector<8x128xf32>
    %75 = arith.select %73, %74, %71 : vector<8x128xi1>, vector<8x128xf32>
    %c0_26 = arith.constant 0 : index
    %c0_27 = arith.constant 0 : index
    %76 = vector.load %arg3[%c0_26, %c0_27] : memref<368x128xf32, #tpu.memory_space<vmem>>, vector<32x40xf32>
    %77 = tpu.concatenate %70, %65, %75, %1, %6 in 0 : vector<8x128xf32>, vector<8x128xf32>, vector<8x128xf32>, vector<8x128xf32>, vector<8x128xf32> -> vector<40x128xf32>
    %cst_28 = arith.constant dense<0.000000e+00> : vector<32x128xf32>
    %78 = tpu.matmul %76, %77, %cst_28 {dimension_numbers = #tpu.dot_dimension_numbers<[1], [0], [0], [1], [0, 0, 1, 1], [], []>} : vector<32x40xf32>, vector<40x128xf32>, vector<32x128xf32> -> vector<32x128xf32>
    %79 = vector.extract_strided_slice %78 {offsets = [0, 0], sizes = [16, 128], strides = [1, 1]} : vector<32x128xf32> to vector<16x128xf32>
    %80 = vector.extract_strided_slice %78 {offsets = [16, 0], sizes = [16, 128], strides = [1, 1]} : vector<32x128xf32> to vector<16x128xf32>
    %81 = tpu.concatenate %79, %34 in 0 : vector<16x128xf32>, vector<16x128xf32> -> vector<32x128xf32>
    %cst_29 = arith.constant dense<0.000000e+00> : vector<32x8xf32>
    %82 = tpu.matmul %81, %4, %cst_29 {dimension_numbers = #tpu.dot_dimension_numbers<[1], [0], [0], [1], [0, 0, 1, 1], [], []>} : vector<32x128xf32>, vector<128x8xf32>, vector<32x8xf32> -> vector<32x8xf32>
    %83 = arith.mulf %81, %81 : vector<32x128xf32>
    %cst_30 = arith.constant dense<0.000000e+00> : vector<32x8xf32>
    %84 = tpu.matmul %83, %4, %cst_30 {dimension_numbers = #tpu.dot_dimension_numbers<[1], [0], [0], [1], [0, 0, 1, 1], [], []>} : vector<32x128xf32>, vector<128x8xf32>, vector<32x8xf32> -> vector<32x8xf32>
    %c120 = arith.constant 120 : index
    %c0_31 = arith.constant 0 : index
    %85 = vector.load %arg3[%c120, %c0_31] : memref<368x128xf32, #tpu.memory_space<vmem>>, vector<32x32xf32>
    %86 = tpu.concatenate %82, %84 in 1 : vector<32x8xf32>, vector<32x8xf32> -> vector<32x16xf32>
    %cst_32 = arith.constant dense<0.000000e+00> : vector<32x16xf32>
    %87 = tpu.matmul %85, %86, %cst_32 {dimension_numbers = #tpu.dot_dimension_numbers<[1], [0], [0], [1], [0, 0, 1, 1], [], []>} : vector<32x32xf32>, vector<32x16xf32>, vector<32x16xf32> -> vector<32x16xf32>
    %88 = vector.extract_strided_slice %87 {offsets = [0, 0], sizes = [32, 8], strides = [1, 1]} : vector<32x16xf32> to vector<32x8xf32>
    %89 = vector.extract_strided_slice %87 {offsets = [0, 8], sizes = [32, 8], strides = [1, 1]} : vector<32x16xf32> to vector<32x8xf32>
    %90 = arith.mulf %88, %88 : vector<32x8xf32>
    %91 = arith.subf %89, %90 : vector<32x8xf32>
    %cst_33 = arith.constant 9.99999974E-6 : f32
    %92 = vector.broadcast %cst_33 : f32 to vector<32x8xf32>
    %93 = arith.addf %91, %92 : vector<32x8xf32>
    %94 = math.rsqrt %93 : vector<32x8xf32>
    %c176 = arith.constant 176 : index
    %c0_34 = arith.constant 0 : index
    %95 = vector.load %arg3[%c176, %c0_34] : memref<368x128xf32, #tpu.memory_space<vmem>>, vector<32x16xf32>
    %96 = vector.extract_strided_slice %95 {offsets = [0, 0], sizes = [32, 8], strides = [1, 1]} : vector<32x16xf32> to vector<32x8xf32>
    %97 = arith.mulf %94, %96 : vector<32x8xf32>
    %98 = vector.extract_strided_slice %95 {offsets = [0, 8], sizes = [32, 8], strides = [1, 1]} : vector<32x16xf32> to vector<32x8xf32>
    %99 = arith.mulf %88, %97 : vector<32x8xf32>
    %100 = arith.subf %98, %99 : vector<32x8xf32>
    %101 = tpu.concatenate %97, %100 in 0 : vector<32x8xf32>, vector<32x8xf32> -> vector<64x8xf32>
    %cst_35 = arith.constant dense<0.000000e+00> : vector<64x128xf32>
    %102 = tpu.matmul %101, %5, %cst_35 {dimension_numbers = #tpu.dot_dimension_numbers<[1], [0], [0], [1], [0, 0, 1, 1], [], []>} : vector<64x8xf32>, vector<8x128xf32>, vector<64x128xf32> -> vector<64x128xf32>
    %103 = vector.extract_strided_slice %102 {offsets = [0, 0], sizes = [32, 128], strides = [1, 1]} : vector<64x128xf32> to vector<32x128xf32>
    %104 = arith.mulf %81, %103 : vector<32x128xf32>
    %105 = vector.extract_strided_slice %102 {offsets = [32, 0], sizes = [32, 128], strides = [1, 1]} : vector<64x128xf32> to vector<32x128xf32>
    %106 = arith.addf %104, %105 : vector<32x128xf32>
    %107 = arith.negf %106 : vector<32x128xf32>
    %108 = math.exp %107 : vector<32x128xf32>
    %cst_36 = arith.constant 1.000000e+00 : f32
    %109 = vector.broadcast %cst_36 : f32 to vector<32x128xf32>
    %110 = arith.addf %109, %108 : vector<32x128xf32>
    %111 = arith.divf %109, %110 : vector<32x128xf32>
    %112 = arith.mulf %106, %111 : vector<32x128xf32>
    %c1_i32_37 = arith.constant 1 : i32
    %113 = tpu.dynamic_rotate %112 by %c1_i32_37 dim 1 : vector<32x128xf32>, i32 -> vector<32x128xf32>
    %cst_38 = arith.constant 0.000000e+00 : f32
    %114 = vector.shape_cast %25 : vector<1x128xi1> to vector<1x128xi1>
    %115 = vector.broadcast %114 : vector<1x128xi1> to vector<32x128xi1>
    %116 = vector.broadcast %cst_38 : f32 to vector<32x128xf32>
    %117 = arith.select %115, %116, %113 : vector<32x128xi1>, vector<32x128xf32>
    %c127_i32_39 = arith.constant 127 : i32
    %118 = tpu.dynamic_rotate %112 by %c127_i32_39 dim 1 : vector<32x128xf32>, i32 -> vector<32x128xf32>
    %cst_40 = arith.constant 0.000000e+00 : f32
    %119 = vector.shape_cast %27 : vector<1x128xi1> to vector<1x128xi1>
    %120 = vector.broadcast %119 : vector<1x128xi1> to vector<32x128xi1>
    %121 = vector.broadcast %cst_40 : f32 to vector<32x128xf32>
    %122 = arith.select %120, %121, %118 : vector<32x128xi1>, vector<32x128xf32>
    %c32 = arith.constant 32 : index
    %c0_41 = arith.constant 0 : index
    %123 = vector.load %arg3[%c32, %c0_41] : memref<368x128xf32, #tpu.memory_space<vmem>>, vector<16x104xf32>
    %124 = tpu.concatenate %117, %112, %122, %6 in 0 : vector<32x128xf32>, vector<32x128xf32>, vector<32x128xf32>, vector<8x128xf32> -> vector<104x128xf32>
    %cst_42 = arith.constant dense<0.000000e+00> : vector<16x128xf32>
    %125 = tpu.matmul %123, %124, %cst_42 {dimension_numbers = #tpu.dot_dimension_numbers<[1], [0], [0], [1], [0, 0, 1, 1], [], []>} : vector<16x104xf32>, vector<104x128xf32>, vector<16x128xf32> -> vector<16x128xf32>
    %126 = arith.mulf %125, %32 : vector<16x128xf32>
    %127 = arith.addf %126, %33 : vector<16x128xf32>
    %cst_43 = arith.constant dense<0.000000e+00> : vector<16x8xf32>
    %128 = tpu.matmul %127, %4, %cst_43 {dimension_numbers = #tpu.dot_dimension_numbers<[1], [0], [0], [1], [0, 0, 1, 1], [], []>} : vector<16x128xf32>, vector<128x8xf32>, vector<16x8xf32> -> vector<16x8xf32>
    %129 = arith.mulf %127, %127 : vector<16x128xf32>
    %cst_44 = arith.constant dense<0.000000e+00> : vector<16x8xf32>
    %130 = tpu.matmul %129, %4, %cst_44 {dimension_numbers = #tpu.dot_dimension_numbers<[1], [0], [0], [1], [0, 0, 1, 1], [], []>} : vector<16x128xf32>, vector<128x8xf32>, vector<16x8xf32> -> vector<16x8xf32>
    %c152 = arith.constant 152 : index
    %c0_45 = arith.constant 0 : index
    %131 = vector.load %arg3[%c152, %c0_45] : memref<368x128xf32, #tpu.memory_space<vmem>>, vector<16x16xf32>
    %132 = tpu.concatenate %128, %130 in 1 : vector<16x8xf32>, vector<16x8xf32> -> vector<16x16xf32>
    %cst_46 = arith.constant dense<0.000000e+00> : vector<16x16xf32>
    %133 = tpu.matmul %131, %132, %cst_46 {dimension_numbers = #tpu.dot_dimension_numbers<[1], [0], [0], [1], [0, 0, 1, 1], [], []>} : vector<16x16xf32>, vector<16x16xf32>, vector<16x16xf32> -> vector<16x16xf32>
    %134 = vector.extract_strided_slice %133 {offsets = [0, 0], sizes = [16, 8], strides = [1, 1]} : vector<16x16xf32> to vector<16x8xf32>
    %135 = vector.extract_strided_slice %133 {offsets = [0, 8], sizes = [16, 8], strides = [1, 1]} : vector<16x16xf32> to vector<16x8xf32>
    %136 = arith.mulf %134, %134 : vector<16x8xf32>
    %137 = arith.subf %135, %136 : vector<16x8xf32>
    %cst_47 = arith.constant 9.99999974E-6 : f32
    %138 = vector.broadcast %cst_47 : f32 to vector<16x8xf32>
    %139 = arith.addf %137, %138 : vector<16x8xf32>
    %140 = math.rsqrt %139 : vector<16x8xf32>
    %c208 = arith.constant 208 : index
    %c0_48 = arith.constant 0 : index
    %141 = vector.load %arg3[%c208, %c0_48] : memref<368x128xf32, #tpu.memory_space<vmem>>, vector<16x16xf32>
    %142 = vector.extract_strided_slice %141 {offsets = [0, 0], sizes = [16, 8], strides = [1, 1]} : vector<16x16xf32> to vector<16x8xf32>
    %143 = arith.mulf %140, %142 : vector<16x8xf32>
    %144 = vector.extract_strided_slice %141 {offsets = [0, 8], sizes = [16, 8], strides = [1, 1]} : vector<16x16xf32> to vector<16x8xf32>
    %145 = arith.mulf %134, %143 : vector<16x8xf32>
    %146 = arith.subf %144, %145 : vector<16x8xf32>
    %147 = tpu.concatenate %143, %146 in 0 : vector<16x8xf32>, vector<16x8xf32> -> vector<32x8xf32>
    %cst_49 = arith.constant dense<0.000000e+00> : vector<32x128xf32>
    %148 = tpu.matmul %147, %5, %cst_49 {dimension_numbers = #tpu.dot_dimension_numbers<[1], [0], [0], [1], [0, 0, 1, 1], [], []>} : vector<32x8xf32>, vector<8x128xf32>, vector<32x128xf32> -> vector<32x128xf32>
    %149 = vector.extract_strided_slice %148 {offsets = [0, 0], sizes = [16, 128], strides = [1, 1]} : vector<32x128xf32> to vector<16x128xf32>
    %150 = arith.mulf %127, %149 : vector<16x128xf32>
    %151 = vector.extract_strided_slice %148 {offsets = [16, 0], sizes = [16, 128], strides = [1, 1]} : vector<32x128xf32> to vector<16x128xf32>
    %152 = arith.addf %150, %151 : vector<16x128xf32>
    %153 = arith.negf %152 : vector<16x128xf32>
    %154 = math.exp %153 : vector<16x128xf32>
    %cst_50 = arith.constant 1.000000e+00 : f32
    %155 = vector.broadcast %cst_50 : f32 to vector<16x128xf32>
    %156 = arith.addf %155, %154 : vector<16x128xf32>
    %157 = arith.divf %155, %156 : vector<16x128xf32>
    %158 = arith.mulf %152, %157 : vector<16x128xf32>
    %c1_i32_51 = arith.constant 1 : i32
    %159 = tpu.dynamic_rotate %158 by %c1_i32_51 dim 1 : vector<16x128xf32>, i32 -> vector<16x128xf32>
    %cst_52 = arith.constant 0.000000e+00 : f32
    %160 = vector.shape_cast %25 : vector<1x128xi1> to vector<1x128xi1>
    %161 = vector.broadcast %160 : vector<1x128xi1> to vector<16x128xi1>
    %162 = vector.broadcast %cst_52 : f32 to vector<16x128xf32>
    %163 = arith.select %161, %162, %159 : vector<16x128xi1>, vector<16x128xf32>
    %c127_i32_53 = arith.constant 127 : i32
    %164 = tpu.dynamic_rotate %158 by %c127_i32_53 dim 1 : vector<16x128xf32>, i32 -> vector<16x128xf32>
    %cst_54 = arith.constant 0.000000e+00 : f32
    %165 = vector.shape_cast %27 : vector<1x128xi1> to vector<1x128xi1>
    %166 = vector.broadcast %165 : vector<1x128xi1> to vector<16x128xi1>
    %167 = vector.broadcast %cst_54 : f32 to vector<16x128xf32>
    %168 = arith.select %166, %167, %164 : vector<16x128xi1>, vector<16x128xf32>
    %c48 = arith.constant 48 : index
    %c0_55 = arith.constant 0 : index
    %169 = vector.load %arg3[%c48, %c0_55] : memref<368x128xf32, #tpu.memory_space<vmem>>, vector<16x56xf32>
    %170 = tpu.concatenate %163, %158, %168, %6 in 0 : vector<16x128xf32>, vector<16x128xf32>, vector<16x128xf32>, vector<8x128xf32> -> vector<56x128xf32>
    %cst_56 = arith.constant dense<0.000000e+00> : vector<16x128xf32>
    %171 = tpu.matmul %169, %170, %cst_56 {dimension_numbers = #tpu.dot_dimension_numbers<[1], [0], [0], [1], [0, 0, 1, 1], [], []>} : vector<16x56xf32>, vector<56x128xf32>, vector<16x128xf32> -> vector<16x128xf32>
    %172 = arith.addf %171, %80 : vector<16x128xf32>
    %c0_57 = arith.constant 0 : index
    %c0_58 = arith.constant 0 : index
    %c0_59 = arith.constant 0 : index
    %173 = vector.load %arg4[%c0_57, %c0_58, %c0_59] : memref<1x16x128xf32, #tpu.memory_space<vmem>>, vector<1x16x128xf32>
    %174 = vector.shape_cast %173 : vector<1x16x128xf32> to vector<16x128xf32>
    %175 = vector.shape_cast %172 : vector<16x128xf32> to vector<1x16x128xf32>
    tpu.vector_store %arg4[%c0_57, %c0_58, %c0_59], %175 {strides = array<i32>} : memref<1x16x128xf32, #tpu.memory_space<vmem>>, vector<1x16x128xf32>,
    return
  }
  func.func @transform_0(%arg0: i32) -> (i32, i32, i32) {
    %c0_i32 = arith.constant 0 : i32
    %c0_i32_0 = arith.constant 0 : i32
    %c0_i32_1 = arith.constant 0 : i32
    return %arg0, %c0_i32, %c0_i32_0 : i32, i32, i32
  }
  func.func @transform_1(%arg0: i32) -> (i32, i32, i32) {
    %c0_i32 = arith.constant 0 : i32
    %c0_i32_0 = arith.constant 0 : i32
    %c0_i32_1 = arith.constant 0 : i32
    return %arg0, %c0_i32, %c0_i32_0 : i32, i32, i32
  }
  func.func @transform_2(%arg0: i32) -> (i32, i32) {
    %c0_i32 = arith.constant 0 : i32
    %c0_i32_0 = arith.constant 0 : i32
    %c0_i32_1 = arith.constant 0 : i32
    return %c0_i32, %c0_i32_0 : i32, i32
  }
  func.func @transform_3(%arg0: i32) -> (i32, i32, i32) {
    %c0_i32 = arith.constant 0 : i32
    %c0_i32_0 = arith.constant 0 : i32
    %c0_i32_1 = arith.constant 0 : i32
    return %arg0, %c0_i32, %c0_i32_0 : i32, i32, i32
  }
}

</mosaic_0001>

<llo_original>
// kernel: resconv_block.1
$region0: #{resconv_block.1}
  #allocation0 [shape = 'u32[]', space=smem, size = 0x4, offset = 0x4, fixed_abs, tag = 'smem constant byte address 0x4 - core index']
  #allocation1 [shape = 'u32[144,128]{1,0:T(1,128)}', space=vmem, size = 0x12000, scoped, tag = 'internal scratch']
  %s0 = inlined_call_operand.vmem [shape: f32[2,8,128], index: 0, kind: input, shape index: {}]
  %s1 = inlined_call_operand.vmem [shape: f32[2,56,128], index: 1, kind: input, shape index: {}]
  %s2 = inlined_call_operand.hbm [shape: f32[368,128], index: 2, kind: input, shape index: {}]
  %s3 = inlined_call_operand.hbm [shape: f32[2,16,128], index: 3, kind: output, shape index: {}]
  %s4 = sld [smem:[#allocation0]]
  $region49: #{resconv_block.1} parent=0
    _
  %s6 = ssub.s32 1, %s4
  %s7 = scalar_select 0, %s6, %s4
  $region1: #{resconv_block.1} parent=0
    #allocation2 [shape = 'u8[188416]{0}', space=vmem, size = 0x2e000, scoped, tag = 'input window, operand 2, single buffered']
    #allocation3 [shape = 's32[2]{0}', space=sflag, size = 0x8, scoped, tag = 'scoped memory for resconv_block.1']
    #allocation4 [shape = 's32[2]{0}', space=sflag, size = 0x8, scoped, tag = 'scoped memory for resconv_block.1']
    #allocation5 [shape = 'u8[16384]{0}', space=vmem, size = 0x4000, scoped, tag = 'output window, operand 0']
    %8 = vsyncpa [#allocation3], 0
    %9 = vsyncpa [#allocation4], 0
    %s10 = scalar_lea.sflag [#allocation4], 1
    %11 = vsyncpa %s10, 0
    loop: start=0, step=1, limit=4
    $region2: #{resconv_block.1} parent=1 // loop_pre_header
      _
    $region3: #{resconv_block.1} parent=1 // loop_header
      %s13 = sphi 0, %s17
      %p14 = scmp.ge.s32.totalorder %s13, 4
      %s23 = sphi 0, %s25
      %s26 = sphi 0, %s23
      %s27 = sphi 0, %s26
      %s43 = sphi 0, %s27
      %s49 = sphi 0, %s51
      %s52 = sphi 0, %s49
      %s53 = sphi 0, %s52
      %s69 = sphi 0, %s53
      %s73 = sphi 0, %s73
      %s75 = sphi 0, %s73
      %s76 = sphi 0, %s75
      %s90 = sphi 0, %s76
      %s96 = sphi 0, %s98
      %s99 = sphi 0, %s96
      %s100 = sphi 0, %s99
      %s116 = sphi 0, %s100
    $region4: #{resconv_block.1} parent=1 // loop_header_branch
      %16 = sbr.rel (%p14) target = $region8
    $region5: #{resconv_block.1} parent=1 // loop_body
      %s18 = ssub.s32 %s13, 1
      %s19 = ssub.s32 %s13, 2
      %s20 = sadd.s32 %s13, 1
      %s21 = ssub.s32 %s13, %s20
      %p22 = scmp.eq.s32.totalorder %s21, 0
      %s24 = sadd.s32 %s23, 1
      %s25 = scalar_select %p22, %s23, %s24
      %p28 = pneg %p22
      %p29 = scmp.eq.s32.totalorder %s13, 1
      %p30 = por %p28, %p29
      %p31 = scmp.ne.s32.totalorder %s23, %s26
      %p32 = scmp.eq.s32.totalorder %s13, 0
      %p33 = por %p31, %p32
      %p34 = scmp.ne.s32.totalorder %s23, %s26
      %p35 = scmp.eq.s32.totalorder %s18, 1
      %p36 = por %p34, %p35
      %p37 = scmp.ne.s32.totalorder %s26, %s27
      %p38 = scmp.eq.s32.totalorder %s18, 0
      %p39 = por %p37, %p38
      %p40 = scmp.ne.s32.totalorder %s26, %s27
      %p41 = scmp.eq.s32.totalorder %s19, 1
      %p42 = por %p40, %p41
      %p44 = scmp.ne.s32.totalorder %s27, %s43
      %p45 = scmp.eq.s32.totalorder %s19, 0
      %p46 = por %p44, %p45
      %s47 = ssub.s32 %s13, %s20
      %p48 = scmp.eq.s32.totalorder %s47, 0
      %s50 = sadd.s32 %s49, 1
      %s51 = scalar_select %p48, %s49, %s50
      %p54 = pneg %p48
      %p55 = scmp.eq.s32.totalorder %s13, 1
      %p56 = por %p54, %p55
      %p57 = scmp.ne.s32.totalorder %s49, %s52
      %p58 = scmp.eq.s32.totalorder %s13, 0
      %p59 = por %p57, %p58
      %p60 = scmp.ne.s32.totalorder %s49, %s52
      %p61 = scmp.eq.s32.totalorder %s18, 1
      %p62 = por %p60, %p61
      %p63 = scmp.ne.s32.totalorder %s52, %s53
      %p64 = scmp.eq.s32.totalorder %s18, 0
      %p65 = por %p63, %p64
      %p66 = scmp.ne.s32.totalorder %s52, %s53
      %p67 = scmp.eq.s32.totalorder %s19, 1
      %p68 = por %p66, %p67
      %p70 = scmp.ne.s32.totalorder %s53, %s69
      %p71 = scmp.eq.s32.totalorder %s19, 0
      %p72 = por %p70, %p71
      %s74 = sadd.s32 %s73, 1
      %p77 = scmp.eq.s32.totalorder %s13, 1
      %p78 = scmp.ne.s32.totalorder %s73, %s75
      %p79 = scmp.eq.s32.totalorder %s13, 0
      %p80 = por %p78, %p79
      %p81 = scmp.ne.s32.totalorder %s73, %s75
      %p82 = scmp.eq.s32.totalorder %s18, 1
      %p83 = por %p81, %p82
      %p84 = scmp.ne.s32.totalorder %s75, %s76
      %p85 = scmp.eq.s32.totalorder %s18, 0
      %p86 = por %p84, %p85
      %p87 = scmp.ne.s32.totalorder %s75, %s76
      %p88 = scmp.eq.s32.totalorder %s19, 1
      %p89 = por %p87, %p88
      %p91 = scmp.ne.s32.totalorder %s76, %s90
      %p92 = scmp.eq.s32.totalorder %s19, 0
      %p93 = por %p91, %p92
      %s94 = ssub.s32 %s13, %s20
      %p95 = scmp.eq.s32.totalorder %s94, 0
      %s97 = sadd.s32 %s96, 1
      %s98 = scalar_select %p95, %s96, %s97
      %p101 = pneg %p95
      %p102 = scmp.eq.s32.totalorder %s13, 1
      %p103 = por %p101, %p102
      %p104 = scmp.ne.s32.totalorder %s96, %s99
      %p105 = scmp.eq.s32.totalorder %s13, 0
      %p106 = por %p104, %p105
      %p107 = scmp.ne.s32.totalorder %s96, %s99
      %p108 = scmp.eq.s32.totalorder %s18, 1
      %p109 = por %p107, %p108
      %p110 = scmp.ne.s32.totalorder %s99, %s100
      %p111 = scmp.eq.s32.totalorder %s18, 0
      %p112 = por %p110, %p111
      %p113 = scmp.ne.s32.totalorder %s99, %s100
      %p114 = scmp.eq.s32.totalorder %s19, 1
      %p115 = por %p113, %p114
      %p117 = scmp.ne.s32.totalorder %s100, %s116
      %p118 = scmp.eq.s32.totalorder %s19, 0
      %p119 = por %p117, %p118
      %p120 = scmp.le.s32.totalorder 1, %s13
      %p121 = scmp.lt.s32.totalorder %s13, 3
      %p122 = pnand %p120, %p121
      %p123 = pneg %p122
      // Predicated region
      $region9: #{resconv_block.1} parent=5 // pred_check
        _
      $region10: #{resconv_block.1} parent=5 // pred_check_branch
        %125 = sbr.rel (%p122) target = $region12
      $region11: #{resconv_block.1} parent=5 // pred_region
        %s126 = ssub.s32 %s13, 1
        // Predicated region
        $region13: #{resconv_block.1} parent=11 // pred_check
          %p127 = pneg %p86
        $region14: #{resconv_block.1} parent=11 // pred_check_branch
          %129 = sbr.rel (%p127) target = $region16
        $region15: #{resconv_block.1} parent=11 // pred_region
          %s131 = ssub.s32 5888, 5888
          %132 = vsyncadd [#allocation3], %s131
          %s133 = sshll.u32 [#allocation2], 4
          %s134 = int_to_ptr.vmem [resolvable:$true] %s133
          %139 = dma.hbm_to_vmem [thread:$0]  %s2, 5888, %s134, [#allocation3], 128, 128, 8
        $region16: #{resconv_block.1} parent=11 // pred_fallthru
          _
      $region12: #{resconv_block.1} parent=5 // pred_fallthru
        _
      %p140 = scmp.lt.s32.totalorder %s13, 2
      // Predicated region
      $region17: #{resconv_block.1} parent=5 // pred_check
        %p141 = pneg %p140
      $region18: #{resconv_block.1} parent=5 // pred_check_branch
        %143 = sbr.rel (%p141) target = $region20
      $region19: #{resconv_block.1} parent=5 // pred_region
        // Predicated region
        $region21: #{resconv_block.1} parent=19 // pred_check
          %p144 = pneg %p33
        $region22: #{resconv_block.1} parent=19 // pred_check_branch
          %146 = sbr.rel (%p144) target = $region24
        $region23: #{resconv_block.1} parent=19 // pred_region
          %p147 = scmp.lt.s32.totalorder %s13, 1
          %s148 = scalar_select %p147, %s13, 1
          %s149 = smul.addr %s148, 8
          %s150 = scalar_lea.vmem %s0, %s149
        $region24: #{resconv_block.1} parent=19 // pred_fallthru
          _
        // Predicated region
        $region25: #{resconv_block.1} parent=19 // pred_check
          %p151 = pneg %p59
        $region26: #{resconv_block.1} parent=19 // pred_check_branch
          %153 = sbr.rel (%p151) target = $region28
        $region27: #{resconv_block.1} parent=19 // pred_region
          %p154 = scmp.lt.s32.totalorder %s13, 1
          %s155 = scalar_select %p154, %s13, 1
          %s156 = smul.addr %s155, 7
          %s157 = smul.addr %s156, 8
          %s158 = scalar_lea.vmem %s1, %s157
        $region28: #{resconv_block.1} parent=19 // pred_fallthru
          _
      $region20: #{resconv_block.1} parent=5 // pred_fallthru
        _
      %p159 = scmp.le.s32.totalorder 1, %s13
      %p160 = scmp.lt.s32.totalorder %s13, 3
      %p161 = pnand %p159, %p160
      %p162 = pneg %p161
      // Predicated region
      $region29: #{resconv_block.1} parent=5 // pred_check
        _
      $region30: #{resconv_block.1} parent=5 // pred_check_branch
        %164 = sbr.rel (%p161) target = $region32
      $region31: #{resconv_block.1} parent=5 // pred_region
        %s165 = ssub.s32 %s13, 1
        // Predicated region
        $region33: #{resconv_block.1} parent=31 // pred_check
          %p166 = pneg %p86
        $region34: #{resconv_block.1} parent=31 // pred_check_branch
          %168 = sbr.rel (%p166) target = $region36
        $region35: #{resconv_block.1} parent=31 // pred_region
          %169 = dma.done [#allocation3], 5888
        $region36: #{resconv_block.1} parent=31 // pred_fallthru
          _
        %p170 = scmp.lt.s32.totalorder %s18, 1
        %s171 = scalar_select %p170, %s18, 1
        %s172 = smul.addr %s171, 8
        %s173 = scalar_lea.vmem %s0, %s172
        %p174 = pneg %p39
        %p175 = pneg %p36
        %p176 = scmp.lt.s32.totalorder %s18, 1
        %s177 = scalar_select %p176, %s18, 1
        %s178 = smul.addr %s177, 7
        %s179 = smul.addr %s178, 8
        %s180 = scalar_lea.vmem %s1, %s179
        %p181 = pneg %p65
        %p182 = pneg %p62
        %p183 = pneg %p86
        %p184 = pneg %p83
        %p185 = pneg %p112
        %p186 = pneg %p109
        %s187 = sand.u32 %s99, 1
        %s188 = scalar_lea.sflag [#allocation4], %s187
        %s189 = sand.u32 %s99, 1
        %s190 = smul.addr %s189, 16
        %s191 = scalar_lea.vmem [#allocation5], %s190
        %p192 = scmp.lt.s32.totalorder %s18, 1
        %s193 = scalar_select %p192, %s18, 1
        %s194 = smul.addr %s193, 8
        %s195 = scalar_lea.vmem %s0, %s194
        %p196 = scmp.lt.s32.totalorder %s18, 1
        %s197 = scalar_select %p196, %s18, 1
        %s198 = smul.addr %s197, 7
        %s199 = smul.addr %s198, 8
        %s200 = scalar_lea.vmem %s1, %s199
        %v201 = vld [vmem:[%s195] sm:$0xff]
        %v202 = vld [vmem:[%s200] sm:$0xff]
        %v203 = vld [vmem:[%s200 + $0x8] sm:$0xff]
        %v204 = vld [vmem:[%s200 + $0x10] sm:$0xff]
        %v205 = vld [vmem:[%s200 + $0x18] sm:$0xff]
        %v206 = vld [vmem:[%s200 + $0x20] sm:$0xff]
        %v207 = vld [vmem:[%s200 + $0x28] sm:$0xff]
        %v208 = vld [vmem:[%s200 + $0x30] sm:$0xff]
        %v209 = vld [vmem:[#allocation2 + $0xf0] sm:$0xff]
        %v210 = vld [vmem:[#allocation2 + $0xf8] sm:$0xff]
        %v211 = vld [vmem:[#allocation2 + $0x100] sm:$0xff]
        %v212 = vld [vmem:[#allocation2 + $0x108] sm:$0xff]
        %v213 = vld [vmem:[#allocation2 + $0x110] sm:$0xff]
        %v214 = vld [vmem:[#allocation2 + $0x118] sm:$0xff]
        %v215 = vld [vmem:[#allocation2 + $0x120] sm:$0xff]
        %v216 = vld [vmem:[#allocation2 + $0x128] sm:$0xff]
        %v217 = vld [vmem:[#allocation2 + $0x130] sm:$0xff]
        %v218 = vld [vmem:[#allocation2 + $0x138] sm:$0xff]
        %v219 = vld [vmem:[#allocation2 + $0x140] sm:$0xff]
        %v220 = vld [vmem:[#allocation2 + $0x148] sm:$0xff]
        %v221 = vld [vmem:[#allocation2 + $0x150] sm:$0xff]
        %v222 = vld [vmem:[#allocation2 + $0x158] sm:$0xff]
        %v223 = vld [vmem:[#allocation2 + $0x160] sm:$0xff]
        %v224 = vld [vmem:[#allocation2 + $0x168] sm:$0xff]
        %v225 = vld [vmem:[#allocation2 + $0xe8] sm:$0xff]
        %v226 = vld [vmem:[#allocation2 + $0xe0] sm:$0xff]
        %v227 = vlaneseq
        %v228 = vand.u32 %v227, 127
        %vm229 = vcmp.lt.s32.totalorder %v228, 0
        %v230 = vsub.s32 0, %v228
        %v231 = vsel %vm229, %v230, %v228
        %v232 = vshrl.u32 %v231, 7
        %v233 = vand.u32 %v231, 127
        %v234 = vsub.s32 0, %v233
        %v235 = vsel %vm229, %v234, %v233
        %vm236 = vcmp.ne.s32.totalorder %v235, 0
        %vm237 = vcmp.lt.s32.totalorder %v235, 0
        %vm238 = vmand %vm237, %vm236
        %v239 = vadd.s32 %v235, 128
        %v240 = vsel %vm238, %v239, %v235
        %vm241 = vcmp.eq.s32.totalorder %v240, 0
        %vm242 = vcmp.eq.s32.totalorder %v240, 127
        %v243 = vld [vmem:[#allocation2 + $0x40] sm:$0xff]
        %v244 = vld [vmem:[#allocation2 + $0x48] sm:$0xff]
        %v245 = vld [vmem:[#allocation2 + $0x50] sm:$0xff]
        %v246 = vld [vmem:[#allocation2 + $0x58] sm:$0xff]
        %v247 = vld [vmem:[#allocation2 + $0x60] sm:$0xff]
        %v248 = vld [vmem:[#allocation2 + $0x68] sm:$0xff]
        %vm249 = vcmask 457728
        %v251 = vsel %vm249, %v243, 0
        %v254 = vsel %vm249, %v244, 0
        %v257 = vsel %vm249, %v245, 0
        %v260 = vsel %vm249, %v246, 0
        %v263 = vsel %vm249, %v247, 0
        %v266 = vsel %vm249, %v248, 0
        %268 = vmatprep.subr.mxu0 0.0
        %269 = vmatpush1.msra.mxu0 0.0
        %270 = vmatprep.subr.mxu0 0.0
        %271 = vmatpush1.msra.mxu0 0.0
        %272 = vmatprep.subr.mxu0 0.0
        %273 = vmatpush1.msra.mxu0 0.0
        %274 = vmatprep.subr.mxu0 0.0
        %275 = vmatpush1.msra.mxu0 0.0
        %276 = vmatprep.subr.mxu0 0.0
        %277 = vmatpush1.msra.mxu0 0.0
        %278 = vmatprep.subr.mxu0 0.0
        %279 = vmatpush1.msra.mxu0 0.0
        %280 = vmatprep.subr.mxu0 0.0
        %281 = vmatpush1.msra.mxu0 0.0
        %282 = vmatprep.subr.mxu0 0.0
        %283 = vmatpush1.msra.mxu0 0.0
        %284 = vmatprep.subr.mxu0 0.0
        %285 = vmatpush1.msra.mxu0 0.0
        %286 = vmatprep.subr.mxu0 0.0
        %287 = vmatpush1.msra.mxu0 %v208
        %288 = vmatprep.subr.mxu0 0.0
        %289 = vmatpush1.msra.mxu0 %v207
        %290 = vmatprep.subr.mxu0 0.0
        %291 = vmatpush1.msra.mxu0 %v206
        %292 = vmatprep.subr.mxu0 0.0
        %293 = vmatpush1.msra.mxu0 %v205
        %294 = vmatprep.subr.mxu0 0.0
        %295 = vmatpush1.msra.mxu0 %v204
        %296 = vmatprep.subr.mxu0 0.0
        %297 = vmatpush1.msra.mxu0 %v203
        %298 = vmatprep.subr.mxu0 0.0
        %299 = vmatpush1.msra.mxu0 %v202
        %300 = vmatprep.subr.mxu0 0.0
        %301 = vmatpush2.msra.mxu0 0.0
        %302 = vmatprep.subr.mxu0 0.0
        %303 = vmatpush2.msra.mxu0 0.0
        %304 = vmatprep.subr.mxu0 0.0
        %305 = vmatpush2.msra.mxu0 0.0
        %306 = vmatprep.subr.mxu0 0.0
        %307 = vmatpush2.msra.mxu0 0.0
        %308 = vmatprep.subr.mxu0 0.0
        %309 = vmatpush2.msra.mxu0 0.0
        %310 = vmatprep.subr.mxu0 0.0
        %311 = vmatpush2.msra.mxu0 0.0
        %312 = vmatprep.subr.mxu0 0.0
        %313 = vmatpush2.msra.mxu0 0.0
        %314 = vmatprep.subr.mxu0 0.0
        %315 = vmatpush2.msra.mxu0 0.0
        %316 = vmatprep.subr.mxu0 0.0
        %317 = vmatpush2.msra.mxu0 0.0
        %318 = vmatprep.subr.mxu0 0.0
        %319 = vmatpush2.msra.mxu0 0.0
        %320 = vmatprep.subr.mxu0 0.0
        %321 = vmatpush2.msra.mxu0 0.0
        %322 = vmatprep.subr.mxu0 0.0
        %323 = vmatpush2.msra.mxu0 0.0
        %324 = vmatprep.subr.mxu0 0.0
        %325 = vmatpush2.msra.mxu0 0.0
        %326 = vmatprep.subr.mxu0 0.0
        %327 = vmatpush2.msra.mxu0 0.0
        %328 = vmatprep.subr.mxu0 0.0
        %329 = vmatpush2.msra.mxu0 0.0
        %330 = vmatprep.subr.mxu0 0.0
        %331 = vmatpush2.msra.mxu0 0.0
        %332 = vmatprep.mubr.f32.mxu0 0.0
        %333 = vmatmul.mubr.f32.gmra.mxu0 %v251
        %v334 = vpop.f32.mrf.mxu0
        %v335 = vadd.f32 0.0, %v334
        %v336 = vpop.f32.mrf.mxu0
        %337 = vmatprep.mubr.f32.mxu0 0.0
        %338 = vmatmul.mubr.f32.gmra.mxu0 %v254
        %v339 = vpop.f32.mrf.mxu0
        %v340 = vadd.f32 0.0, %v339
        %v341 = vpop.f32.mrf.mxu0
        %342 = vmatprep.mubr.f32.mxu0 0.0
        %343 = vmatmul.mubr.f32.gmra.mxu0 %v257
        %v344 = vpop.f32.mrf.mxu0
        %v345 = vadd.f32 0.0, %v344
        %v346 = vpop.f32.mrf.mxu0
        %347 = vmatprep.mubr.f32.mxu0 0.0
        %348 = vmatmul.mubr.f32.gmra.mxu0 %v260
        %v349 = vpop.f32.mrf.mxu0
        %v350 = vadd.f32 0.0, %v349
        %v351 = vpop.f32.mrf.mxu0
        %352 = vmatprep.mubr.f32.mxu0 0.0
        %353 = vmatmul.mubr.f32.gmra.mxu0 %v263
        %v354 = vpop.f32.mrf.mxu0
        %v355 = vadd.f32 0.0, %v354
        %v356 = vpop.f32.mrf.mxu0
        %357 = vmatprep.mubr.f32.mxu0 0.0
        %358 = vmatmul.mubr.f32.gmra.mxu0 %v266
        %v359 = vpop.f32.mrf.mxu0
        %v360 = vadd.f32 0.0, %v359
        %v361 = vpop.f32.mrf.mxu0
        %362 = vdwg.mxu0
        %v363 = vadd.f32 %v335, 1.0
        %v364 = vadd.f32 %v340, 1.0
        %365 = vmatprep.subr.mxu0 0.0
        %366 = vmatpush1.msra.mxu0 %v224
        %367 = vmatprep.subr.mxu0 0.0
        %368 = vmatpush1.msra.mxu0 %v223
        %369 = vmatprep.subr.mxu0 0.0
        %370 = vmatpush1.msra.mxu0 %v222
        %371 = vmatprep.subr.mxu0 0.0
        %372 = vmatpush1.msra.mxu0 %v221
        %373 = vmatprep.subr.mxu0 0.0
        %374 = vmatpush1.msra.mxu0 %v220
        %375 = vmatprep.subr.mxu0 0.0
        %376 = vmatpush1.msra.mxu0 %v219
        %377 = vmatprep.subr.mxu0 0.0
        %378 = vmatpush1.msra.mxu0 %v218
        %379 = vmatprep.subr.mxu0 0.0
        %380 = vmatpush1.msra.mxu0 %v217
        %381 = vmatprep.subr.mxu0 0.0
        %382 = vmatpush1.msra.mxu0 %v216
        %383 = vmatprep.subr.mxu0 0.0
        %384 = vmatpush1.msra.mxu0 %v215
        %385 = vmatprep.subr.mxu0 0.0
        %386 = vmatpush1.msra.mxu0 %v214
        %387 = vmatprep.subr.mxu0 0.0
        %388 = vmatpush1.msra.mxu0 %v213
        %389 = vmatprep.subr.mxu0 0.0
        %390 = vmatpush1.msra.mxu0 %v212
        %391 = vmatprep.subr.mxu0 0.0
        %392 = vmatpush1.msra.mxu0 %v211
        %393 = vmatprep.subr.mxu0 0.0
        %394 = vmatpush1.msra.mxu0 %v210
        %395 = vmatprep.subr.mxu0 0.0
        %396 = vmatpush1.msra.mxu0 %v209
        %397 = vmatprep.subr.mxu0 0.0
        %398 = vmatpush2.msra.mxu0 0.0
        %399 = vmatprep.subr.mxu0 0.0
        %400 = vmatpush2.msra.mxu0 0.0
        %401 = vmatprep.subr.mxu0 0.0
        %402 = vmatpush2.msra.mxu0 0.0
        %403 = vmatprep.subr.mxu0 0.0
        %404 = vmatpush2.msra.mxu0 0.0
        %405 = vmatprep.subr.mxu0 0.0
        %406 = vmatpush2.msra.mxu0 0.0
        %407 = vmatprep.subr.mxu0 0.0
        %408 = vmatpush2.msra.mxu0 0.0
        %409 = vmatprep.subr.mxu0 0.0
        %410 = vmatpush2.msra.mxu0 0.0
        %411 = vmatprep.subr.mxu0 0.0
        %412 = vmatpush2.msra.mxu0 0.0
        %413 = vmatprep.subr.mxu0 0.0
        %414 = vmatpush2.msra.mxu0 0.0
        %415 = vmatprep.subr.mxu0 0.0
        %416 = vmatpush2.msra.mxu0 0.0
        %417 = vmatprep.subr.mxu0 0.0
        %418 = vmatpush2.msra.mxu0 0.0
        %419 = vmatprep.subr.mxu0 0.0
        %420 = vmatpush2.msra.mxu0 0.0
        %421 = vmatprep.subr.mxu0 0.0
        %422 = vmatpush2.msra.mxu0 0.0
        %423 = vmatprep.subr.mxu0 0.0
        %424 = vmatpush2.msra.mxu0 0.0
        %425 = vmatprep.subr.mxu0 0.0
        %426 = vmatpush2.msra.mxu0 0.0
        %427 = vmatprep.subr.mxu0 0.0
        %428 = vmatpush2.msra.mxu0 0.0
        %429 = vmatprep.mubr.f32.mxu0 0.0
        %430 = vmatmul.mubr.f32.gmra.mxu0 %v201
        %v431 = vpop.f32.mrf.mxu0
        %v432 = vadd.f32 0.0, %v431
        %v433 = vpop.f32.mrf.mxu0
        %434 = vdwg.mxu0
        %v435 = vmul.f32 %v201, %v201
        %436 = vmatprep.subr.mxu0 0.0
        %437 = vmatpush1.msra.mxu0 %v224
        %438 = vmatprep.subr.mxu0 0.0
        %439 = vmatpush1.msra.mxu0 %v223
        %440 = vmatprep.subr.mxu0 0.0
        %441 = vmatpush1.msra.mxu0 %v222
        %442 = vmatprep.subr.mxu0 0.0
        %443 = vmatpush1.msra.mxu0 %v221
        %444 = vmatprep.subr.mxu0 0.0
        %445 = vmatpush1.msra.mxu0 %v220
        %446 = vmatprep.subr.mxu0 0.0
        %447 = vmatpush1.msra.mxu0 %v219
        %448 = vmatprep.subr.mxu0 0.0
        %449 = vmatpush1.msra.mxu0 %v218
        %450 = vmatprep.subr.mxu0 0.0
        %451 = vmatpush1.msra.mxu0 %v217
        %452 = vmatprep.subr.mxu0 0.0
        %453 = vmatpush1.msra.mxu0 %v216
        %454 = vmatprep.subr.mxu0 0.0
        %455 = vmatpush1.msra.mxu0 %v215
        %456 = vmatprep.subr.mxu0 0.0
        %457 = vmatpush1.msra.mxu0 %v214
        %458 = vmatprep.subr.mxu0 0.0
        %459 = vmatpush1.msra.mxu0 %v213
        %460 = vmatprep.subr.mxu0 0.0
        %461 = vmatpush1.msra.mxu0 %v212
        %462 = vmatprep.subr.mxu0 0.0
        %463 = vmatpush1.msra.mxu0 %v211
        %464 = vmatprep.subr.mxu0 0.0
        %465 = vmatpush1.msra.mxu0 %v210
        %466 = vmatprep.subr.mxu0 0.0
        %467 = vmatpush1.msra.mxu0 %v209
        %468 = vmatprep.subr.mxu0 0.0
        %469 = vmatpush2.msra.mxu0 0.0
        %470 = vmatprep.subr.mxu0 0.0
        %471 = vmatpush2.msra.mxu0 0.0
        %472 = vmatprep.subr.mxu0 0.0
        %473 = vmatpush2.msra.mxu0 0.0
        %474 = vmatprep.subr.mxu0 0.0
        %475 = vmatpush2.msra.mxu0 0.0
        %476 = vmatprep.subr.mxu0 0.0
        %477 = vmatpush2.msra.mxu0 0.0
        %478 = vmatprep.subr.mxu0 0.0
        %479 = vmatpush2.msra.mxu0 0.0
        %480 = vmatprep.subr.mxu0 0.0
        %481 = vmatpush2.msra.mxu0 0.0
        %482 = vmatprep.subr.mxu0 0.0
        %483 = vmatpush2.msra.mxu0 0.0
        %484 = vmatprep.subr.mxu0 0.0
        %485 = vmatpush2.msra.mxu0 0.0
        %486 = vmatprep.subr.mxu0 0.0
        %487 = vmatpush2.msra.mxu0 0.0
        %488 = vmatprep.subr.mxu0 0.0
        %489 = vmatpush2.msra.mxu0 0.0
        %490 = vmatprep.subr.mxu0 0.0
        %491 = vmatpush2.msra.mxu0 0.0
        %492 = vmatprep.subr.mxu0 0.0
        %493 = vmatpush2.msra.mxu0 0.0
        %494 = vmatprep.subr.mxu0 0.0
        %495 = vmatpush2.msra.mxu0 0.0
        %496 = vmatprep.subr.mxu0 0.0
        %497 = vmatpush2.msra.mxu0 0.0
        %498 = vmatprep.subr.mxu0 0.0
        %499 = vmatpush2.msra.mxu0 0.0
        %500 = vmatprep.mubr.f32.mxu0 0.0
        %501 = vmatmul.mubr.f32.gmra.mxu0 %v435
        %v502 = vpop.f32.mrf.mxu0
        %v503 = vadd.f32 0.0, %v502
        %v504 = vpop.f32.mrf.mxu0
        %505 = vdwg.mxu0
        %v506 = vld [vmem:[#allocation2 + $0x70] sm:$0xff]
        %508 = vrot.lane.b32.xlu0 %v503, 8
        %v509 = vpop.permute.xlu0 %508
        %vm511 = vcmask 64512
        %v512 = vsel %vm511, %v432, %v509
        %v514 = vsel %vm511, %v506, 0
        %516 = vmatprep.subr.mxu0 0.0
        %517 = vmatpush1.msra.mxu0 0.0
        %518 = vmatprep.subr.mxu0 0.0
        %519 = vmatpush1.msra.mxu0 0.0
        %520 = vmatprep.subr.mxu0 0.0
        %521 = vmatpush1.msra.mxu0 0.0
        %522 = vmatprep.subr.mxu0 0.0
        %523 = vmatpush1.msra.mxu0 0.0
        %524 = vmatprep.subr.mxu0 0.0
        %525 = vmatpush1.msra.mxu0 0.0
        %526 = vmatprep.subr.mxu0 0.0
        %527 = vmatpush1.msra.mxu0 0.0
        %528 = vmatprep.subr.mxu0 0.0
        %529 = vmatpush1.msra.mxu0 0.0
        %530 = vmatprep.subr.mxu0 0.0
        %531 = vmatpush1.msra.mxu0 0.0
        %532 = vmatprep.subr.mxu0 0.0
        %533 = vmatpush1.msra.mxu0 0.0
        %534 = vmatprep.subr.mxu0 0.0
        %535 = vmatpush1.msra.mxu0 0.0
        %536 = vmatprep.subr.mxu0 0.0
        %537 = vmatpush1.msra.mxu0 0.0
        %538 = vmatprep.subr.mxu0 0.0
        %539 = vmatpush1.msra.mxu0 0.0
        %540 = vmatprep.subr.mxu0 0.0
        %541 = vmatpush1.msra.mxu0 0.0
        %542 = vmatprep.subr.mxu0 0.0
        %543 = vmatpush1.msra.mxu0 0.0
        %544 = vmatprep.subr.mxu0 0.0
        %545 = vmatpush1.msra.mxu0 0.0
        %546 = vmatprep.subr.mxu0 0.0
        %547 = vmatpush1.msra.mxu0 %v512
        %548 = vmatprep.subr.mxu0 0.0
        %549 = vmatpush2.msra.mxu0 0.0
        %550 = vmatprep.subr.mxu0 0.0
        %551 = vmatpush2.msra.mxu0 0.0
        %552 = vmatprep.subr.mxu0 0.0
        %553 = vmatpush2.msra.mxu0 0.0
        %554 = vmatprep.subr.mxu0 0.0
        %555 = vmatpush2.msra.mxu0 0.0
        %556 = vmatprep.subr.mxu0 0.0
        %557 = vmatpush2.msra.mxu0 0.0
        %558 = vmatprep.subr.mxu0 0.0
        %559 = vmatpush2.msra.mxu0 0.0
        %560 = vmatprep.subr.mxu0 0.0
        %561 = vmatpush2.msra.mxu0 0.0
        %562 = vmatprep.subr.mxu0 0.0
        %563 = vmatpush2.msra.mxu0 0.0
        %564 = vmatprep.subr.mxu0 0.0
        %565 = vmatpush2.msra.mxu0 0.0
        %566 = vmatprep.subr.mxu0 0.0
        %567 = vmatpush2.msra.mxu0 0.0
        %568 = vmatprep.subr.mxu0 0.0
        %569 = vmatpush2.msra.mxu0 0.0
        %570 = vmatprep.subr.mxu0 0.0
        %571 = vmatpush2.msra.mxu0 0.0
        %572 = vmatprep.subr.mxu0 0.0
        %573 = vmatpush2.msra.mxu0 0.0
        %574 = vmatprep.subr.mxu0 0.0
        %575 = vmatpush2.msra.mxu0 0.0
        %576 = vmatprep.subr.mxu0 0.0
        %577 = vmatpush2.msra.mxu0 0.0
        %578 = vmatprep.subr.mxu0 0.0
        %579 = vmatpush2.msra.mxu0 0.0
        %580 = vmatprep.mubr.f32.mxu0 0.0
        %581 = vmatmul.mubr.f32.gmra.mxu0 %v514
        %v582 = vpop.f32.mrf.mxu0
        %v583 = vadd.f32 0.0, %v582
        %v584 = vpop.f32.mrf.mxu0
        %585 = vdwg.mxu0
        %v586 = vmul.f32 %v583, %v583
        %588 = vrot.lane.b32.xlu0 %v586, 8
        %v589 = vpop.permute.xlu0 %588
        %v591 = vsub.f32 %v583, %v589
        %v592 = vadd.f32 %v591, 1e-05
        %v593 = vrsqrt.pop %v592
        %v594 = vld [vmem:[#allocation2 + $0xa8] sm:$0xff]
        %596 = vrot.lane.b32.xlu0 %v594, 8
        %v597 = vpop.permute.xlu0 %596
        %v599 = vmul.f32 %v593, %v597
        %601 = vrot.lane.b32.xlu0 %v599, 120
        %v602 = vpop.permute.xlu0 %601
        %v604 = vmul.f32 %v583, %v602
        %606 = vrot.lane.b32.xlu0 %v604, 8
        %v607 = vpop.permute.xlu0 %606
        %v609 = vsub.f32 %v594, %v607
        %611 = vrot.lane.b32.xlu0 %v609, 120
        %v612 = vpop.permute.xlu0 %611
        %v613 = vsel %vm511, %v602, 0
        %v615 = vsel %vm511, %v612, 0
        %617 = vmatprep.subr.mxu0 0.0
        %618 = vmatpush1.msra.mxu0 0.0
        %619 = vmatprep.subr.mxu0 0.0
        %620 = vmatpush1.msra.mxu0 0.0
        %621 = vmatprep.subr.mxu0 0.0
        %622 = vmatpush1.msra.mxu0 0.0
        %623 = vmatprep.subr.mxu0 0.0
        %624 = vmatpush1.msra.mxu0 0.0
        %625 = vmatprep.subr.mxu0 0.0
        %626 = vmatpush1.msra.mxu0 0.0
        %627 = vmatprep.subr.mxu0 0.0
        %628 = vmatpush1.msra.mxu0 0.0
        %629 = vmatprep.subr.mxu0 0.0
        %630 = vmatpush1.msra.mxu0 0.0
        %631 = vmatprep.subr.mxu0 0.0
        %632 = vmatpush1.msra.mxu0 0.0
        %633 = vmatprep.subr.mxu0 0.0
        %634 = vmatpush1.msra.mxu0 0.0
        %635 = vmatprep.subr.mxu0 0.0
        %636 = vmatpush1.msra.mxu0 0.0
        %637 = vmatprep.subr.mxu0 0.0
        %638 = vmatpush1.msra.mxu0 0.0
        %639 = vmatprep.subr.mxu0 0.0
        %640 = vmatpush1.msra.mxu0 0.0
        %641 = vmatprep.subr.mxu0 0.0
        %642 = vmatpush1.msra.mxu0 0.0
        %643 = vmatprep.subr.mxu0 0.0
        %644 = vmatpush1.msra.mxu0 0.0
        %645 = vmatprep.subr.mxu0 0.0
        %646 = vmatpush1.msra.mxu0 0.0
        %647 = vmatprep.subr.mxu0 0.0
        %648 = vmatpush1.msra.mxu0 %v225
        %649 = vmatprep.subr.mxu0 0.0
        %650 = vmatpush2.msra.mxu0 0.0
        %651 = vmatprep.subr.mxu0 0.0
        %652 = vmatpush2.msra.mxu0 0.0
        %653 = vmatprep.subr.mxu0 0.0
        %654 = vmatpush2.msra.mxu0 0.0
        %655 = vmatprep.subr.mxu0 0.0
        %656 = vmatpush2.msra.mxu0 0.0
        %657 = vmatprep.subr.mxu0 0.0
        %658 = vmatpush2.msra.mxu0 0.0
        %659 = vmatprep.subr.mxu0 0.0
        %660 = vmatpush2.msra.mxu0 0.0
        %661 = vmatprep.subr.mxu0 0.0
        %662 = vmatpush2.msra.mxu0 0.0
        %663 = vmatprep.subr.mxu0 0.0
        %664 = vmatpush2.msra.mxu0 0.0
        %665 = vmatprep.subr.mxu0 0.0
        %666 = vmatpush2.msra.mxu0 0.0
        %667 = vmatprep.subr.mxu0 0.0
        %668 = vmatpush2.msra.mxu0 0.0
        %669 = vmatprep.subr.mxu0 0.0
        %670 = vmatpush2.msra.mxu0 0.0
        %671 = vmatprep.subr.mxu0 0.0
        %672 = vmatpush2.msra.mxu0 0.0
        %673 = vmatprep.subr.mxu0 0.0
        %674 = vmatpush2.msra.mxu0 0.0
        %675 = vmatprep.subr.mxu0 0.0
        %676 = vmatpush2.msra.mxu0 0.0
        %677 = vmatprep.subr.mxu0 0.0
        %678 = vmatpush2.msra.mxu0 0.0
        %679 = vmatprep.subr.mxu0 0.0
        %680 = vmatpush2.msra.mxu0 0.0
        %681 = vmatprep.mubr.f32.mxu0 0.0
        %682 = vmatmul.mubr.f32.gmra.mxu0 %v613
        %v683 = vpop.f32.mrf.mxu0
        %v684 = vadd.f32 0.0, %v683
        %v685 = vpop.f32.mrf.mxu0
        %686 = vmatprep.mubr.f32.mxu0 0.0
        %687 = vmatmul.mubr.f32.gmra.mxu0 %v615
        %v688 = vpop.f32.mrf.mxu0
        %v689 = vadd.f32 0.0, %v688
        %v690 = vpop.f32.mrf.mxu0
        %691 = vdwg.mxu0
        %v692 = vmul.f32 %v201, %v684
        %v693 = vadd.f32 %v692, %v689
        %v694 = vxor.u32 %v693, 2147483648
        %v695 = vmul.f32 %v694, 1.442695
        %v696 = vpow.pop %v695
        %v697 = vadd.f32 %v696, 1.0
        %v698 = vrcp.pop %v697
        %v699 = vmul.f32 1.0, %v698
        %v700 = vmul.f32 %v693, %v699
        %701 = vrot.lane.b32.xlu0 %v700, 1
        %v702 = vpop.permute.xlu0 %701
        %v703 = vsel %vm241, 1, 0
        %vm704 = vcmp.eq.s32.totalorder %v703, 1
        %v705 = vsel %vm704, 0.0, %v702
        %706 = vrot.lane.b32.xlu0 %v700, 127
        %v707 = vpop.permute.xlu0 %706
        %v708 = vsel %vm242, 1, 0
        %vm709 = vcmp.eq.s32.totalorder %v708, 1
        %v710 = vsel %vm709, 0.0, %v707
        %v711 = vld [vmem:[#allocation2] sm:$0xff]
        %v712 = vld [vmem:[#allocation2 + $0x8] sm:$0xff]
        %v713 = vld [vmem:[#allocation2 + $0x10] sm:$0xff]
        %v714 = vld [vmem:[#allocation2 + $0x18] sm:$0xff]
        %vm715 = vcmask 326656
        %v717 = vsel %vm715, %v711, 0
        %v720 = vsel %vm715, %v712, 0
        %v723 = vsel %vm715, %v713, 0
        %v726 = vsel %vm715, %v714, 0
        %728 = vmatprep.subr.mxu0 0.0
        %729 = vmatpush1.msra.mxu0 0.0
        %730 = vmatprep.subr.mxu0 0.0
        %731 = vmatpush1.msra.mxu0 0.0
        %732 = vmatprep.subr.mxu0 0.0
        %733 = vmatpush1.msra.mxu0 0.0
        %734 = vmatprep.subr.mxu0 0.0
        %735 = vmatpush1.msra.mxu0 0.0
        %736 = vmatprep.subr.mxu0 0.0
        %737 = vmatpush1.msra.mxu0 0.0
        %738 = vmatprep.subr.mxu0 0.0
        %739 = vmatpush1.msra.mxu0 0.0
        %740 = vmatprep.subr.mxu0 0.0
        %741 = vmatpush1.msra.mxu0 0.0
        %742 = vmatprep.subr.mxu0 0.0
        %743 = vmatpush1.msra.mxu0 0.0
        %744 = vmatprep.subr.mxu0 0.0
        %745 = vmatpush1.msra.mxu0 0.0
        %746 = vmatprep.subr.mxu0 0.0
        %747 = vmatpush1.msra.mxu0 0.0
        %748 = vmatprep.subr.mxu0 0.0
        %749 = vmatpush1.msra.mxu0 0.0
        %750 = vmatprep.subr.mxu0 0.0
        %751 = vmatpush1.msra.mxu0 %v226
        %752 = vmatprep.subr.mxu0 0.0
        %753 = vmatpush1.msra.mxu0 %v201
        %754 = vmatprep.subr.mxu0 0.0
        %755 = vmatpush1.msra.mxu0 %v710
        %756 = vmatprep.subr.mxu0 0.0
        %757 = vmatpush1.msra.mxu0 %v700
        %758 = vmatprep.subr.mxu0 0.0
        %759 = vmatpush1.msra.mxu0 %v705
        %760 = vmatprep.subr.mxu0 0.0
        %761 = vmatpush2.msra.mxu0 0.0
        %762 = vmatprep.subr.mxu0 0.0
        %763 = vmatpush2.msra.mxu0 0.0
        %764 = vmatprep.subr.mxu0 0.0
        %765 = vmatpush2.msra.mxu0 0.0
        %766 = vmatprep.subr.mxu0 0.0
        %767 = vmatpush2.msra.mxu0 0.0
        %768 = vmatprep.subr.mxu0 0.0
        %769 = vmatpush2.msra.mxu0 0.0
        %770 = vmatprep.subr.mxu0 0.0
        %771 = vmatpush2.msra.mxu0 0.0
        %772 = vmatprep.subr.mxu0 0.0
        %773 = vmatpush2.msra.mxu0 0.0
        %774 = vmatprep.subr.mxu0 0.0
        %775 = vmatpush2.msra.mxu0 0.0
        %776 = vmatprep.subr.mxu0 0.0
        %777 = vmatpush2.msra.mxu0 0.0
        %778 = vmatprep.subr.mxu0 0.0
        %779 = vmatpush2.msra.mxu0 0.0
        %780 = vmatprep.subr.mxu0 0.0
        %781 = vmatpush2.msra.mxu0 0.0
        %782 = vmatprep.subr.mxu0 0.0
        %783 = vmatpush2.msra.mxu0 0.0
        %784 = vmatprep.subr.mxu0 0.0
        %785 = vmatpush2.msra.mxu0 0.0
        %786 = vmatprep.subr.mxu0 0.0
        %787 = vmatpush2.msra.mxu0 0.0
        %788 = vmatprep.subr.mxu0 0.0
        %789 = vmatpush2.msra.mxu0 0.0
        %790 = vmatprep.subr.mxu0 0.0
        %791 = vmatpush2.msra.mxu0 0.0
        %792 = vmatprep.mubr.f32.mxu0 0.0
        %793 = vmatmul.mubr.f32.gmra.mxu0 %v717
        %v794 = vpop.f32.mrf.mxu0
        %v795 = vadd.f32 0.0, %v794
        %v796 = vpop.f32.mrf.mxu0
        %797 = vmatprep.mubr.f32.mxu0 0.0
        %798 = vmatmul.mubr.f32.gmra.mxu0 %v720
        %v799 = vpop.f32.mrf.mxu0
        %v800 = vadd.f32 0.0, %v799
        %v801 = vpop.f32.mrf.mxu0
        %802 = vmatprep.mubr.f32.mxu0 0.0
        %803 = vmatmul.mubr.f32.gmra.mxu0 %v723
        %v804 = vpop.f32.mrf.mxu0
        %v805 = vadd.f32 0.0, %v804
        %v806 = vpop.f32.mrf.mxu0
        %807 = vmatprep.mubr.f32.mxu0 0.0
        %808 = vmatmul.mubr.f32.gmra.mxu0 %v726
        %v809 = vpop.f32.mrf.mxu0
        %v810 = vadd.f32 0.0, %v809
        %v811 = vpop.f32.mrf.mxu0
        %812 = vdwg.mxu0
        %813 = vmatprep.subr.mxu0 0.0
        %814 = vmatpush1.msra.mxu0 %v224
        %815 = vmatprep.subr.mxu0 0.0
        %816 = vmatpush1.msra.mxu0 %v223
        %817 = vmatprep.subr.mxu0 0.0
        %818 = vmatpush1.msra.mxu0 %v222
        %819 = vmatprep.subr.mxu0 0.0
        %820 = vmatpush1.msra.mxu0 %v221
        %821 = vmatprep.subr.mxu0 0.0
        %822 = vmatpush1.msra.mxu0 %v220
        %823 = vmatprep.subr.mxu0 0.0
        %824 = vmatpush1.msra.mxu0 %v219
        %825 = vmatprep.subr.mxu0 0.0
        %826 = vmatpush1.msra.mxu0 %v218
        %827 = vmatprep.subr.mxu0 0.0
        %828 = vmatpush1.msra.mxu0 %v217
        %829 = vmatprep.subr.mxu0 0.0
        %830 = vmatpush1.msra.mxu0 %v216
        %831 = vmatprep.subr.mxu0 0.0
        %832 = vmatpush1.msra.mxu0 %v215
        %833 = vmatprep.subr.mxu0 0.0
        %834 = vmatpush1.msra.mxu0 %v214
        %835 = vmatprep.subr.mxu0 0.0
        %836 = vmatpush1.msra.mxu0 %v213
        %837 = vmatprep.subr.mxu0 0.0
        %838 = vmatpush1.msra.mxu0 %v212
        %839 = vmatprep.subr.mxu0 0.0
        %840 = vmatpush1.msra.mxu0 %v211
        %841 = vmatprep.subr.mxu0 0.0
        %842 = vmatpush1.msra.mxu0 %v210
        %843 = vmatprep.subr.mxu0 0.0
        %844 = vmatpush1.msra.mxu0 %v209
        %845 = vmatprep.subr.mxu0 0.0
        %846 = vmatpush2.msra.mxu0 0.0
        %847 = vmatprep.subr.mxu0 0.0
        %848 = vmatpush2.msra.mxu0 0.0
        %849 = vmatprep.subr.mxu0 0.0
        %850 = vmatpush2.msra.mxu0 0.0
        %851 = vmatprep.subr.mxu0 0.0
        %852 = vmatpush2.msra.mxu0 0.0
        %853 = vmatprep.subr.mxu0 0.0
        %854 = vmatpush2.msra.mxu0 0.0
        %855 = vmatprep.subr.mxu0 0.0
        %856 = vmatpush2.msra.mxu0 0.0
        %857 = vmatprep.subr.mxu0 0.0
        %858 = vmatpush2.msra.mxu0 0.0
        %859 = vmatprep.subr.mxu0 0.0
        %860 = vmatpush2.msra.mxu0 0.0
        %861 = vmatprep.subr.mxu0 0.0
        %862 = vmatpush2.msra.mxu0 0.0
        %863 = vmatprep.subr.mxu0 0.0
        %864 = vmatpush2.msra.mxu0 0.0
        %865 = vmatprep.subr.mxu0 0.0
        %866 = vmatpush2.msra.mxu0 0.0
        %867 = vmatprep.subr.mxu0 0.0
        %868 = vmatpush2.msra.mxu0 0.0
        %869 = vmatprep.subr.mxu0 0.0
        %870 = vmatpush2.msra.mxu0 0.0
        %871 = vmatprep.subr.mxu0 0.0
        %872 = vmatpush2.msra.mxu0 0.0
        %873 = vmatprep.subr.mxu0 0.0
        %874 = vmatpush2.msra.mxu0 0.0
        %875 = vmatprep.subr.mxu0 0.0
        %876 = vmatpush2.msra.mxu0 0.0
        %877 = vmatprep.mubr.f32.mxu0 0.0
        %878 = vmatmul.mubr.f32.gmra.mxu0 %v795
        %v879 = vpop.f32.mrf.mxu0
        %v880 = vadd.f32 0.0, %v879
        %v881 = vpop.f32.mrf.mxu0
        %882 = vmatprep.mubr.f32.mxu0 0.0
        %883 = vmatmul.mubr.f32.gmra.mxu0 %v800
        %v884 = vpop.f32.mrf.mxu0
        %v885 = vadd.f32 0.0, %v884
        %v886 = vpop.f32.mrf.mxu0
        %887 = vmatprep.mubr.f32.mxu0 0.0
        %888 = vmatmul.mubr.f32.gmra.mxu0 %v355
        %v889 = vpop.f32.mrf.mxu0
        %v890 = vadd.f32 0.0, %v889
        %v891 = vpop.f32.mrf.mxu0
        %892 = vmatprep.mubr.f32.mxu0 0.0
        %893 = vmatmul.mubr.f32.gmra.mxu0 %v360
        %v894 = vpop.f32.mrf.mxu0
        %v895 = vadd.f32 0.0, %v894
        %v896 = vpop.f32.mrf.mxu0
        %897 = vdwg.mxu0
        %v898 = vmul.f32 %v795, %v795
        %v899 = vmul.f32 %v800, %v800
        %v900 = vmul.f32 %v355, %v355
        %v901 = vmul.f32 %v360, %v360
        %902 = vmatprep.subr.mxu0 0.0
        %903 = vmatpush1.msra.mxu0 %v224
        %904 = vmatprep.subr.mxu0 0.0
        %905 = vmatpush1.msra.mxu0 %v223
        %906 = vmatprep.subr.mxu0 0.0
        %907 = vmatpush1.msra.mxu0 %v222
        %908 = vmatprep.subr.mxu0 0.0
        %909 = vmatpush1.msra.mxu0 %v221
        %910 = vmatprep.subr.mxu0 0.0
        %911 = vmatpush1.msra.mxu0 %v220
        %912 = vmatprep.subr.mxu0 0.0
        %913 = vmatpush1.msra.mxu0 %v219
        %914 = vmatprep.subr.mxu0 0.0
        %915 = vmatpush1.msra.mxu0 %v218
        %916 = vmatprep.subr.mxu0 0.0
        %917 = vmatpush1.msra.mxu0 %v217
        %918 = vmatprep.subr.mxu0 0.0
        %919 = vmatpush1.msra.mxu0 %v216
        %920 = vmatprep.subr.mxu0 0.0
        %921 = vmatpush1.msra.mxu0 %v215
        %922 = vmatprep.subr.mxu0 0.0
        %923 = vmatpush1.msra.mxu0 %v214
        %924 = vmatprep.subr.mxu0 0.0
        %925 = vmatpush1.msra.mxu0 %v213
        %926 = vmatprep.subr.mxu0 0.0
        %927 = vmatpush1.msra.mxu0 %v212
        %928 = vmatprep.subr.mxu0 0.0
        %929 = vmatpush1.msra.mxu0 %v211
        %930 = vmatprep.subr.mxu0 0.0
        %931 = vmatpush1.msra.mxu0 %v210
        %932 = vmatprep.subr.mxu0 0.0
        %933 = vmatpush1.msra.mxu0 %v209
        %934 = vmatprep.subr.mxu0 0.0
        %935 = vmatpush2.msra.mxu0 0.0
        %936 = vmatprep.subr.mxu0 0.0
        %937 = vmatpush2.msra.mxu0 0.0
        %938 = vmatprep.subr.mxu0 0.0
        %939 = vmatpush2.msra.mxu0 0.0
        %940 = vmatprep.subr.mxu0 0.0
        %941 = vmatpush2.msra.mxu0 0.0
        %942 = vmatprep.subr.mxu0 0.0
        %943 = vmatpush2.msra.mxu0 0.0
        %944 = vmatprep.subr.mxu0 0.0
        %945 = vmatpush2.msra.mxu0 0.0
        %946 = vmatprep.subr.mxu0 0.0
        %947 = vmatpush2.msra.mxu0 0.0
        %948 = vmatprep.subr.mxu0 0.0
        %949 = vmatpush2.msra.mxu0 0.0
        %950 = vmatprep.subr.mxu0 0.0
        %951 = vmatpush2.msra.mxu0 0.0
        %952 = vmatprep.subr.mxu0 0.0
        %953 = vmatpush2.msra.mxu0 0.0
        %954 = vmatprep.subr.mxu0 0.0
        %955 = vmatpush2.msra.mxu0 0.0
        %956 = vmatprep.subr.mxu0 0.0
        %957 = vmatpush2.msra.mxu0 0.0
        %958 = vmatprep.subr.mxu0 0.0
        %959 = vmatpush2.msra.mxu0 0.0
        %960 = vmatprep.subr.mxu0 0.0
        %961 = vmatpush2.msra.mxu0 0.0
        %962 = vmatprep.subr.mxu0 0.0
        %963 = vmatpush2.msra.mxu0 0.0
        %964 = vmatprep.subr.mxu0 0.0
        %965 = vmatpush2.msra.mxu0 0.0
        %966 = vmatprep.mubr.f32.mxu0 0.0
        %967 = vmatmul.mubr.f32.gmra.mxu0 %v898
        %v968 = vpop.f32.mrf.mxu0
        %v969 = vadd.f32 0.0, %v968
        %v970 = vpop.f32.mrf.mxu0
        %971 = vmatprep.mubr.f32.mxu0 0.0
        %972 = vmatmul.mubr.f32.gmra.mxu0 %v899
        %v973 = vpop.f32.mrf.mxu0
        %v974 = vadd.f32 0.0, %v973
        %v975 = vpop.f32.mrf.mxu0
        %976 = vmatprep.mubr.f32.mxu0 0.0
        %977 = vmatmul.mubr.f32.gmra.mxu0 %v900
        %v978 = vpop.f32.mrf.mxu0
        %v979 = vadd.f32 0.0, %v978
        %v980 = vpop.f32.mrf.mxu0
        %981 = vmatprep.mubr.f32.mxu0 0.0
        %982 = vmatmul.mubr.f32.gmra.mxu0 %v901
        %v983 = vpop.f32.mrf.mxu0
        %v984 = vadd.f32 0.0, %v983
        %v985 = vpop.f32.mrf.mxu0
        %986 = vdwg.mxu0
        %v987 = vld [vmem:[#allocation2 + $0x78] sm:$0xff]
        %v988 = vld [vmem:[#allocation2 + $0x80] sm:$0xff]
        %v989 = vld [vmem:[#allocation2 + $0x88] sm:$0xff]
        %v990 = vld [vmem:[#allocation2 + $0x90] sm:$0xff]
        %995 = vrot.lane.b32.xlu0 %v969, 8
        %v996 = vpop.permute.xlu0 %995
        %997 = vrot.lane.b32.xlu0 %v974, 8
        %v998 = vpop.permute.xlu0 %997
        %999 = vrot.lane.b32.xlu0 %v979, 8
        %v1000 = vpop.permute.xlu0 %999
        %1001 = vrot.lane.b32.xlu0 %v984, 8
        %v1002 = vpop.permute.xlu0 %1001
        %v1007 = vsel %vm511, %v880, %v996
        %v1008 = vsel %vm511, %v885, %v998
        %v1009 = vsel %vm511, %v890, %v1000
        %v1010 = vsel %vm511, %v895, %v1002
        %vm1011 = vcmask 261120
        %v1013 = vsel %vm1011, %v987, 0
        %v1016 = vsel %vm1011, %v988, 0
        %v1019 = vsel %vm1011, %v989, 0
        %v1022 = vsel %vm1011, %v990, 0
        %1024 = vmatprep.subr.mxu0 0.0
        %1025 = vmatpush1.msra.mxu0 0.0
        %1026 = vmatprep.subr.mxu0 0.0
        %1027 = vmatpush1.msra.mxu0 0.0
        %1028 = vmatprep.subr.mxu0 0.0
        %1029 = vmatpush1.msra.mxu0 0.0
        %1030 = vmatprep.subr.mxu0 0.0
        %1031 = vmatpush1.msra.mxu0 0.0
        %1032 = vmatprep.subr.mxu0 0.0
        %1033 = vmatpush1.msra.mxu0 0.0
        %1034 = vmatprep.subr.mxu0 0.0
        %1035 = vmatpush1.msra.mxu0 0.0
        %1036 = vmatprep.subr.mxu0 0.0
        %1037 = vmatpush1.msra.mxu0 0.0
        %1038 = vmatprep.subr.mxu0 0.0
        %1039 = vmatpush1.msra.mxu0 0.0
        %1040 = vmatprep.subr.mxu0 0.0
        %1041 = vmatpush1.msra.mxu0 0.0
        %1042 = vmatprep.subr.mxu0 0.0
        %1043 = vmatpush1.msra.mxu0 0.0
        %1044 = vmatprep.subr.mxu0 0.0
        %1045 = vmatpush1.msra.mxu0 0.0
        %1046 = vmatprep.subr.mxu0 0.0
        %1047 = vmatpush1.msra.mxu0 0.0
        %1048 = vmatprep.subr.mxu0 0.0
        %1049 = vmatpush1.msra.mxu0 %v1010
        %1050 = vmatprep.subr.mxu0 0.0
        %1051 = vmatpush1.msra.mxu0 %v1009
        %1052 = vmatprep.subr.mxu0 0.0
        %1053 = vmatpush1.msra.mxu0 %v1008
        %1054 = vmatprep.subr.mxu0 0.0
        %1055 = vmatpush1.msra.mxu0 %v1007
        %1056 = vmatprep.subr.mxu0 0.0
        %1057 = vmatpush2.msra.mxu0 0.0
        %1058 = vmatprep.subr.mxu0 0.0
        %1059 = vmatpush2.msra.mxu0 0.0
        %1060 = vmatprep.subr.mxu0 0.0
        %1061 = vmatpush2.msra.mxu0 0.0
        %1062 = vmatprep.subr.mxu0 0.0
        %1063 = vmatpush2.msra.mxu0 0.0
        %1064 = vmatprep.subr.mxu0 0.0
        %1065 = vmatpush2.msra.mxu0 0.0
        %1066 = vmatprep.subr.mxu0 0.0
        %1067 = vmatpush2.msra.mxu0 0.0
        %1068 = vmatprep.subr.mxu0 0.0
        %1069 = vmatpush2.msra.mxu0 0.0
        %1070 = vmatprep.subr.mxu0 0.0
        %1071 = vmatpush2.msra.mxu0 0.0
        %1072 = vmatprep.subr.mxu0 0.0
        %1073 = vmatpush2.msra.mxu0 0.0
        %1074 = vmatprep.subr.mxu0 0.0
        %1075 = vmatpush2.msra.mxu0 0.0
        %1076 = vmatprep.subr.mxu0 0.0
        %1077 = vmatpush2.msra.mxu0 0.0
        %1078 = vmatprep.subr.mxu0 0.0
        %1079 = vmatpush2.msra.mxu0 0.0
        %1080 = vmatprep.subr.mxu0 0.0
        %1081 = vmatpush2.msra.mxu0 0.0
        %1082 = vmatprep.subr.mxu0 0.0
        %1083 = vmatpush2.msra.mxu0 0.0
        %1084 = vmatprep.subr.mxu0 0.0
        %1085 = vmatpush2.msra.mxu0 0.0
        %1086 = vmatprep.subr.mxu0 0.0
        %1087 = vmatpush2.msra.mxu0 0.0
        %1088 = vmatprep.mubr.f32.mxu0 0.0
        %1089 = vmatmul.mubr.f32.gmra.mxu0 %v1013
        %v1090 = vpop.f32.mrf.mxu0
        %v1091 = vadd.f32 0.0, %v1090
        %v1092 = vpop.f32.mrf.mxu0
        %1093 = vmatprep.mubr.f32.mxu0 0.0
        %1094 = vmatmul.mubr.f32.gmra.mxu0 %v1016
        %v1095 = vpop.f32.mrf.mxu0
        %v1096 = vadd.f32 0.0, %v1095
        %v1097 = vpop.f32.mrf.mxu0
        %1098 = vmatprep.mubr.f32.mxu0 0.0
        %1099 = vmatmul.mubr.f32.gmra.mxu0 %v1019
        %v1100 = vpop.f32.mrf.mxu0
        %v1101 = vadd.f32 0.0, %v1100
        %v1102 = vpop.f32.mrf.mxu0
        %1103 = vmatprep.mubr.f32.mxu0 0.0
        %1104 = vmatmul.mubr.f32.gmra.mxu0 %v1022
        %v1105 = vpop.f32.mrf.mxu0
        %v1106 = vadd.f32 0.0, %v1105
        %v1107 = vpop.f32.mrf.mxu0
        %1108 = vdwg.mxu0
        %v1109 = vmul.f32 %v1091, %v1091
        %v1110 = vmul.f32 %v1096, %v1096
        %v1111 = vmul.f32 %v1101, %v1101
        %v1112 = vmul.f32 %v1106, %v1106
        %1117 = vrot.lane.b32.xlu0 %v1109, 8
        %v1118 = vpop.permute.xlu0 %1117
        %1119 = vrot.lane.b32.xlu0 %v1110, 8
        %v1120 = vpop.permute.xlu0 %1119
        %1121 = vrot.lane.b32.xlu0 %v1111, 8
        %v1122 = vpop.permute.xlu0 %1121
        %1123 = vrot.lane.b32.xlu0 %v1112, 8
        %v1124 = vpop.permute.xlu0 %1123
        %v1129 = vsub.f32 %v1091, %v1118
        %v1130 = vsub.f32 %v1096, %v1120
        %v1131 = vsub.f32 %v1101, %v1122
        %v1132 = vsub.f32 %v1106, %v1124
        %v1133 = vadd.f32 %v1129, 1e-05
        %v1134 = vadd.f32 %v1130, 1e-05
        %v1135 = vadd.f32 %v1131, 1e-05
        %v1136 = vadd.f32 %v1132, 1e-05
        %v1137 = vrsqrt.pop %v1133
        %v1138 = vrsqrt.pop %v1134
        %v1139 = vrsqrt.pop %v1135
        %v1140 = vrsqrt.pop %v1136
        %v1141 = vld [vmem:[#allocation2 + $0xb0] sm:$0xff]
        %v1142 = vld [vmem:[#allocation2 + $0xb8] sm:$0xff]
        %v1143 = vld [vmem:[#allocation2 + $0xc0] sm:$0xff]
        %v1144 = vld [vmem:[#allocation2 + $0xc8] sm:$0xff]
        %1149 = vrot.lane.b32.xlu0 %v1141, 8
        %v1150 = vpop.permute.xlu0 %1149
        %1151 = vrot.lane.b32.xlu0 %v1142, 8
        %v1152 = vpop.permute.xlu0 %1151
        %1153 = vrot.lane.b32.xlu0 %v1143, 8
        %v1154 = vpop.permute.xlu0 %1153
        %1155 = vrot.lane.b32.xlu0 %v1144, 8
        %v1156 = vpop.permute.xlu0 %1155
        %v1161 = vmul.f32 %v1137, %v1150
        %v1162 = vmul.f32 %v1138, %v1152
        %v1163 = vmul.f32 %v1139, %v1154
        %v1164 = vmul.f32 %v1140, %v1156
        %1169 = vrot.lane.b32.xlu0 %v1161, 120
        %v1170 = vpop.permute.xlu0 %1169
        %1171 = vrot.lane.b32.xlu0 %v1162, 120
        %v1172 = vpop.permute.xlu0 %1171
        %1173 = vrot.lane.b32.xlu0 %v1163, 120
        %v1174 = vpop.permute.xlu0 %1173
        %1175 = vrot.lane.b32.xlu0 %v1164, 120
        %v1176 = vpop.permute.xlu0 %1175
        %v1181 = vmul.f32 %v1091, %v1170
        %v1182 = vmul.f32 %v1096, %v1172
        %v1183 = vmul.f32 %v1101, %v1174
        %v1184 = vmul.f32 %v1106, %v1176
        %1189 = vrot.lane.b32.xlu0 %v1181, 8
        %v1190 = vpop.permute.xlu0 %1189
        %1191 = vrot.lane.b32.xlu0 %v1182, 8
        %v1192 = vpop.permute.xlu0 %1191
        %1193 = vrot.lane.b32.xlu0 %v1183, 8
        %v1194 = vpop.permute.xlu0 %1193
        %1195 = vrot.lane.b32.xlu0 %v1184, 8
        %v1196 = vpop.permute.xlu0 %1195
        %v1201 = vsub.f32 %v1141, %v1190
        %v1202 = vsub.f32 %v1142, %v1192
        %v1203 = vsub.f32 %v1143, %v1194
        %v1204 = vsub.f32 %v1144, %v1196
        %1209 = vrot.lane.b32.xlu0 %v1201, 120
        %v1210 = vpop.permute.xlu0 %1209
        %1211 = vrot.lane.b32.xlu0 %v1202, 120
        %v1212 = vpop.permute.xlu0 %1211
        %1213 = vrot.lane.b32.xlu0 %v1203, 120
        %v1214 = vpop.permute.xlu0 %1213
        %1215 = vrot.lane.b32.xlu0 %v1204, 120
        %v1216 = vpop.permute.xlu0 %1215
        %v1217 = vsel %vm511, %v1170, 0
        %v1219 = vsel %vm511, %v1172, 0
        %v1221 = vsel %vm511, %v1174, 0
        %v1223 = vsel %vm511, %v1176, 0
        %v1225 = vsel %vm511, %v1210, 0
        %v1227 = vsel %vm511, %v1212, 0
        %v1229 = vsel %vm511, %v1214, 0
        %v1231 = vsel %vm511, %v1216, 0
        %1233 = vmatprep.subr.mxu0 0.0
        %1234 = vmatpush1.msra.mxu0 0.0
        %1235 = vmatprep.subr.mxu0 0.0
        %1236 = vmatpush1.msra.mxu0 0.0
        %1237 = vmatprep.subr.mxu0 0.0
        %1238 = vmatpush1.msra.mxu0 0.0
        %1239 = vmatprep.subr.mxu0 0.0
        %1240 = vmatpush1.msra.mxu0 0.0
        %1241 = vmatprep.subr.mxu0 0.0
        %1242 = vmatpush1.msra.mxu0 0.0
        %1243 = vmatprep.subr.mxu0 0.0
        %1244 = vmatpush1.msra.mxu0 0.0
        %1245 = vmatprep.subr.mxu0 0.0
        %1246 = vmatpush1.msra.mxu0 0.0
        %1247 = vmatprep.subr.mxu0 0.0
        %1248 = vmatpush1.msra.mxu0 0.0
        %1249 = vmatprep.subr.mxu0 0.0
        %1250 = vmatpush1.msra.mxu0 0.0
        %1251 = vmatprep.subr.mxu0 0.0
        %1252 = vmatpush1.msra.mxu0 0.0
        %1253 = vmatprep.subr.mxu0 0.0
        %1254 = vmatpush1.msra.mxu0 0.0
        %1255 = vmatprep.subr.mxu0 0.0
        %1256 = vmatpush1.msra.mxu0 0.0
        %1257 = vmatprep.subr.mxu0 0.0
        %1258 = vmatpush1.msra.mxu0 0.0
        %1259 = vmatprep.subr.mxu0 0.0
        %1260 = vmatpush1.msra.mxu0 0.0
        %1261 = vmatprep.subr.mxu0 0.0
        %1262 = vmatpush1.msra.mxu0 0.0
        %1263 = vmatprep.subr.mxu0 0.0
        %1264 = vmatpush1.msra.mxu0 %v225
        %1265 = vmatprep.subr.mxu0 0.0
        %1266 = vmatpush2.msra.mxu0 0.0
        %1267 = vmatprep.subr.mxu0 0.0
        %1268 = vmatpush2.msra.mxu0 0.0
        %1269 = vmatprep.subr.mxu0 0.0
        %1270 = vmatpush2.msra.mxu0 0.0
        %1271 = vmatprep.subr.mxu0 0.0
        %1272 = vmatpush2.msra.mxu0 0.0
        %1273 = vmatprep.subr.mxu0 0.0
        %1274 = vmatpush2.msra.mxu0 0.0
        %1275 = vmatprep.subr.mxu0 0.0
        %1276 = vmatpush2.msra.mxu0 0.0
        %1277 = vmatprep.subr.mxu0 0.0
        %1278 = vmatpush2.msra.mxu0 0.0
        %1279 = vmatprep.subr.mxu0 0.0
        %1280 = vmatpush2.msra.mxu0 0.0
        %1281 = vmatprep.subr.mxu0 0.0
        %1282 = vmatpush2.msra.mxu0 0.0
        %1283 = vmatprep.subr.mxu0 0.0
        %1284 = vmatpush2.msra.mxu0 0.0
        %1285 = vmatprep.subr.mxu0 0.0
        %1286 = vmatpush2.msra.mxu0 0.0
        %1287 = vmatprep.subr.mxu0 0.0
        %1288 = vmatpush2.msra.mxu0 0.0
        %1289 = vmatprep.subr.mxu0 0.0
        %1290 = vmatpush2.msra.mxu0 0.0
        %1291 = vmatprep.subr.mxu0 0.0
        %1292 = vmatpush2.msra.mxu0 0.0
        %1293 = vmatprep.subr.mxu0 0.0
        %1294 = vmatpush2.msra.mxu0 0.0
        %1295 = vmatprep.subr.mxu0 0.0
        %1296 = vmatpush2.msra.mxu0 0.0
        %1297 = vmatprep.mubr.f32.mxu0 0.0
        %1298 = vmatmul.mubr.f32.gmra.mxu0 %v1217
        %v1299 = vpop.f32.mrf.mxu0
        %v1300 = vadd.f32 0.0, %v1299
        %v1301 = vpop.f32.mrf.mxu0
        %1302 = vmatprep.mubr.f32.mxu0 0.0
        %1303 = vmatmul.mubr.f32.gmra.mxu0 %v1219
        %v1304 = vpop.f32.mrf.mxu0
        %v1305 = vadd.f32 0.0, %v1304
        %v1306 = vpop.f32.mrf.mxu0
        %1307 = vmatprep.mubr.f32.mxu0 0.0
        %1308 = vmatmul.mubr.f32.gmra.mxu0 %v1221
        %v1309 = vpop.f32.mrf.mxu0
        %v1310 = vadd.f32 0.0, %v1309
        %v1311 = vpop.f32.mrf.mxu0
        %1312 = vmatprep.mubr.f32.mxu0 0.0
        %1313 = vmatmul.mubr.f32.gmra.mxu0 %v1223
        %v1314 = vpop.f32.mrf.mxu0
        %v1315 = vadd.f32 0.0, %v1314
        %v1316 = vpop.f32.mrf.mxu0
        %1317 = vmatprep.mubr.f32.mxu0 0.0
        %1318 = vmatmul.mubr.f32.gmra.mxu0 %v1225
        %v1319 = vpop.f32.mrf.mxu0
        %v1320 = vadd.f32 0.0, %v1319
        %v1321 = vpop.f32.mrf.mxu0
        %1322 = vmatprep.mubr.f32.mxu0 0.0
        %1323 = vmatmul.mubr.f32.gmra.mxu0 %v1227
        %v1324 = vpop.f32.mrf.mxu0
        %v1325 = vadd.f32 0.0, %v1324
        %v1326 = vpop.f32.mrf.mxu0
        %1327 = vmatprep.mubr.f32.mxu0 0.0
        %1328 = vmatmul.mubr.f32.gmra.mxu0 %v1229
        %v1329 = vpop.f32.mrf.mxu0
        %v1330 = vadd.f32 0.0, %v1329
        %v1331 = vpop.f32.mrf.mxu0
        %1332 = vmatprep.mubr.f32.mxu0 0.0
        %1333 = vmatmul.mubr.f32.gmra.mxu0 %v1231
        %v1334 = vpop.f32.mrf.mxu0
        %v1335 = vadd.f32 0.0, %v1334
        %v1336 = vpop.f32.mrf.mxu0
        %1337 = vdwg.mxu0
        %v1338 = vmul.f32 %v795, %v1300
        %v1339 = vmul.f32 %v800, %v1305
        %v1340 = vmul.f32 %v355, %v1310
        %v1341 = vmul.f32 %v360, %v1315
        %v1342 = vadd.f32 %v1338, %v1320
        %v1343 = vadd.f32 %v1339, %v1325
        %v1344 = vadd.f32 %v1340, %v1330
        %v1345 = vadd.f32 %v1341, %v1335
        %v1346 = vxor.u32 %v1342, 2147483648
        %v1347 = vxor.u32 %v1343, 2147483648
        %v1348 = vxor.u32 %v1344, 2147483648
        %v1349 = vxor.u32 %v1345, 2147483648
        %v1350 = vmul.f32 %v1346, 1.442695
        %v1351 = vpow.pop %v1350
        %v1352 = vmul.f32 %v1347, 1.442695
        %v1353 = vpow.pop %v1352
        %v1354 = vmul.f32 %v1348, 1.442695
        %v1355 = vpow.pop %v1354
        %v1356 = vmul.f32 %v1349, 1.442695
        %v1357 = vpow.pop %v1356
        %v1358 = vadd.f32 %v1351, 1.0
        %v1359 = vadd.f32 %v1353, 1.0
        %v1360 = vadd.f32 %v1355, 1.0
        %v1361 = vadd.f32 %v1357, 1.0
        %v1362 = vrcp.pop %v1358
        %v1363 = vmul.f32 1.0, %v1362
        %v1364 = vrcp.pop %v1359
        %v1365 = vmul.f32 1.0, %v1364
        %v1366 = vrcp.pop %v1360
        %v1367 = vmul.f32 1.0, %v1366
        %v1368 = vrcp.pop %v1361
        %v1369 = vmul.f32 1.0, %v1368
        %v1370 = vmul.f32 %v1342, %v1363
        %v1371 = vmul.f32 %v1343, %v1365
        %v1372 = vmul.f32 %v1344, %v1367
        %v1373 = vmul.f32 %v1345, %v1369
        %1374 = vrot.lane.b32.xlu0 %v1370, 1
        %v1375 = vpop.permute.xlu0 %1374
        %1376 = vrot.lane.b32.xlu0 %v1371, 1
        %v1377 = vpop.permute.xlu0 %1376
        %1378 = vrot.lane.b32.xlu0 %v1372, 1
        %v1379 = vpop.permute.xlu0 %1378
        %1380 = vrot.lane.b32.xlu0 %v1373, 1
        %v1381 = vpop.permute.xlu0 %1380
        %v1382 = vsel %vm704, 0.0, %v1375
        %v1383 = vsel %vm704, 0.0, %v1377
        %v1384 = vsel %vm704, 0.0, %v1379
        %v1385 = vsel %vm704, 0.0, %v1381
        %1386 = vrot.lane.b32.xlu0 %v1370, 127
        %v1387 = vpop.permute.xlu0 %1386
        %1388 = vrot.lane.b32.xlu0 %v1371, 127
        %v1389 = vpop.permute.xlu0 %1388
        %1390 = vrot.lane.b32.xlu0 %v1372, 127
        %v1391 = vpop.permute.xlu0 %1390
        %1392 = vrot.lane.b32.xlu0 %v1373, 127
        %v1393 = vpop.permute.xlu0 %1392
        %v1394 = vsel %vm709, 0.0, %v1387
        %v1395 = vsel %vm709, 0.0, %v1389
        %v1396 = vsel %vm709, 0.0, %v1391
        %v1397 = vsel %vm709, 0.0, %v1393
        %v1398 = vld [vmem:[#allocation2 + $0x20] sm:$0xff]
        %v1399 = vld [vmem:[#allocation2 + $0x28] sm:$0xff]
        %vm1400 = vcmask 850944
        %v1402 = vsel %vm1400, %v1398, 0
        %v1405 = vsel %vm1400, %v1399, 0
        %1407 = vmatprep.subr.mxu0 0.0
        %1408 = vmatpush1.msra.mxu0 0.0
        %1409 = vmatprep.subr.mxu0 0.0
        %1410 = vmatpush1.msra.mxu0 0.0
        %1411 = vmatprep.subr.mxu0 0.0
        %1412 = vmatpush1.msra.mxu0 0.0
        %1413 = vmatprep.subr.mxu0 0.0
        %1414 = vmatpush1.msra.mxu0 %v226
        %1415 = vmatprep.subr.mxu0 0.0
        %1416 = vmatpush1.msra.mxu0 %v1397
        %1417 = vmatprep.subr.mxu0 0.0
        %1418 = vmatpush1.msra.mxu0 %v1396
        %1419 = vmatprep.subr.mxu0 0.0
        %1420 = vmatpush1.msra.mxu0 %v1395
        %1421 = vmatprep.subr.mxu0 0.0
        %1422 = vmatpush1.msra.mxu0 %v1394
        %1423 = vmatprep.subr.mxu0 0.0
        %1424 = vmatpush1.msra.mxu0 %v1373
        %1425 = vmatprep.subr.mxu0 0.0
        %1426 = vmatpush1.msra.mxu0 %v1372
        %1427 = vmatprep.subr.mxu0 0.0
        %1428 = vmatpush1.msra.mxu0 %v1371
        %1429 = vmatprep.subr.mxu0 0.0
        %1430 = vmatpush1.msra.mxu0 %v1370
        %1431 = vmatprep.subr.mxu0 0.0
        %1432 = vmatpush1.msra.mxu0 %v1385
        %1433 = vmatprep.subr.mxu0 0.0
        %1434 = vmatpush1.msra.mxu0 %v1384
        %1435 = vmatprep.subr.mxu0 0.0
        %1436 = vmatpush1.msra.mxu0 %v1383
        %1437 = vmatprep.subr.mxu0 0.0
        %1438 = vmatpush1.msra.mxu0 %v1382
        %1439 = vmatprep.subr.mxu0 0.0
        %1440 = vmatpush2.msra.mxu0 0.0
        %1441 = vmatprep.subr.mxu0 0.0
        %1442 = vmatpush2.msra.mxu0 0.0
        %1443 = vmatprep.subr.mxu0 0.0
        %1444 = vmatpush2.msra.mxu0 0.0
        %1445 = vmatprep.subr.mxu0 0.0
        %1446 = vmatpush2.msra.mxu0 0.0
        %1447 = vmatprep.subr.mxu0 0.0
        %1448 = vmatpush2.msra.mxu0 0.0
        %1449 = vmatprep.subr.mxu0 0.0
        %1450 = vmatpush2.msra.mxu0 0.0
        %1451 = vmatprep.subr.mxu0 0.0
        %1452 = vmatpush2.msra.mxu0 0.0
        %1453 = vmatprep.subr.mxu0 0.0
        %1454 = vmatpush2.msra.mxu0 0.0
        %1455 = vmatprep.subr.mxu0 0.0
        %1456 = vmatpush2.msra.mxu0 0.0
        %1457 = vmatprep.subr.mxu0 0.0
        %1458 = vmatpush2.msra.mxu0 0.0
        %1459 = vmatprep.subr.mxu0 0.0
        %1460 = vmatpush2.msra.mxu0 0.0
        %1461 = vmatprep.subr.mxu0 0.0
        %1462 = vmatpush2.msra.mxu0 0.0
        %1463 = vmatprep.subr.mxu0 0.0
        %1464 = vmatpush2.msra.mxu0 0.0
        %1465 = vmatprep.subr.mxu0 0.0
        %1466 = vmatpush2.msra.mxu0 0.0
        %1467 = vmatprep.subr.mxu0 0.0
        %1468 = vmatpush2.msra.mxu0 0.0
        %1469 = vmatprep.subr.mxu0 0.0
        %1470 = vmatpush2.msra.mxu0 0.0
        %1471 = vmatprep.mubr.f32.mxu0 0.0
        %1472 = vmatmul.mubr.f32.gmra.mxu0 %v1402
        %v1473 = vpop.f32.mrf.mxu0
        %v1474 = vadd.f32 0.0, %v1473
        %v1475 = vpop.f32.mrf.mxu0
        %1476 = vmatprep.mubr.f32.mxu0 0.0
        %1477 = vmatmul.mubr.f32.gmra.mxu0 %v1405
        %v1478 = vpop.f32.mrf.mxu0
        %v1479 = vadd.f32 0.0, %v1478
        %v1480 = vpop.f32.mrf.mxu0
        %1481 = vdwg.mxu0
        %v1482 = vmul.f32 %v1474, %v363
        %v1483 = vmul.f32 %v1479, %v364
        %v1484 = vadd.f32 %v1482, %v345
        %v1485 = vadd.f32 %v1483, %v350
        %1486 = vmatprep.subr.mxu0 0.0
        %1487 = vmatpush1.msra.mxu0 %v224
        %1488 = vmatprep.subr.mxu0 0.0
        %1489 = vmatpush1.msra.mxu0 %v223
        %1490 = vmatprep.subr.mxu0 0.0
        %1491 = vmatpush1.msra.mxu0 %v222
        %1492 = vmatprep.subr.mxu0 0.0
        %1493 = vmatpush1.msra.mxu0 %v221
        %1494 = vmatprep.subr.mxu0 0.0
        %1495 = vmatpush1.msra.mxu0 %v220
        %1496 = vmatprep.subr.mxu0 0.0
        %1497 = vmatpush1.msra.mxu0 %v219
        %1498 = vmatprep.subr.mxu0 0.0
        %1499 = vmatpush1.msra.mxu0 %v218
        %1500 = vmatprep.subr.mxu0 0.0
        %1501 = vmatpush1.msra.mxu0 %v217
        %1502 = vmatprep.subr.mxu0 0.0
        %1503 = vmatpush1.msra.mxu0 %v216
        %1504 = vmatprep.subr.mxu0 0.0
        %1505 = vmatpush1.msra.mxu0 %v215
        %1506 = vmatprep.subr.mxu0 0.0
        %1507 = vmatpush1.msra.mxu0 %v214
        %1508 = vmatprep.subr.mxu0 0.0
        %1509 = vmatpush1.msra.mxu0 %v213
        %1510 = vmatprep.subr.mxu0 0.0
        %1511 = vmatpush1.msra.mxu0 %v212
        %1512 = vmatprep.subr.mxu0 0.0
        %1513 = vmatpush1.msra.mxu0 %v211
        %1514 = vmatprep.subr.mxu0 0.0
        %1515 = vmatpush1.msra.mxu0 %v210
        %1516 = vmatprep.subr.mxu0 0.0
        %1517 = vmatpush1.msra.mxu0 %v209
        %1518 = vmatprep.subr.mxu0 0.0
        %1519 = vmatpush2.msra.mxu0 0.0
        %1520 = vmatprep.subr.mxu0 0.0
        %1521 = vmatpush2.msra.mxu0 0.0
        %1522 = vmatprep.subr.mxu0 0.0
        %1523 = vmatpush2.msra.mxu0 0.0
        %1524 = vmatprep.subr.mxu0 0.0
        %1525 = vmatpush2.msra.mxu0 0.0
        %1526 = vmatprep.subr.mxu0 0.0
        %1527 = vmatpush2.msra.mxu0 0.0
        %1528 = vmatprep.subr.mxu0 0.0
        %1529 = vmatpush2.msra.mxu0 0.0
        %1530 = vmatprep.subr.mxu0 0.0
        %1531 = vmatpush2.msra.mxu0 0.0
        %1532 = vmatprep.subr.mxu0 0.0
        %1533 = vmatpush2.msra.mxu0 0.0
        %1534 = vmatprep.subr.mxu0 0.0
        %1535 = vmatpush2.msra.mxu0 0.0
        %1536 = vmatprep.subr.mxu0 0.0
        %1537 = vmatpush2.msra.mxu0 0.0
        %1538 = vmatprep.subr.mxu0 0.0
        %1539 = vmatpush2.msra.mxu0 0.0
        %1540 = vmatprep.subr.mxu0 0.0
        %1541 = vmatpush2.msra.mxu0 0.0
        %1542 = vmatprep.subr.mxu0 0.0
        %1543 = vmatpush2.msra.mxu0 0.0
        %1544 = vmatprep.subr.mxu0 0.0
        %1545 = vmatpush2.msra.mxu0 0.0
        %1546 = vmatprep.subr.mxu0 0.0
        %1547 = vmatpush2.msra.mxu0 0.0
        %1548 = vmatprep.subr.mxu0 0.0
        %1549 = vmatpush2.msra.mxu0 0.0
        %1550 = vmatprep.mubr.f32.mxu0 0.0
        %1551 = vmatmul.mubr.f32.gmra.mxu0 %v1484
        %v1552 = vpop.f32.mrf.mxu0
        %v1553 = vadd.f32 0.0, %v1552
        %v1554 = vpop.f32.mrf.mxu0
        %1555 = vmatprep.mubr.f32.mxu0 0.0
        %1556 = vmatmul.mubr.f32.gmra.mxu0 %v1485
        %v1557 = vpop.f32.mrf.mxu0
        %v1558 = vadd.f32 0.0, %v1557
        %v1559 = vpop.f32.mrf.mxu0
        %1560 = vdwg.mxu0
        %v1561 = vmul.f32 %v1484, %v1484
        %v1562 = vmul.f32 %v1485, %v1485
        %1563 = vmatprep.subr.mxu0 0.0
        %1564 = vmatpush1.msra.mxu0 %v224
        %1565 = vmatprep.subr.mxu0 0.0
        %1566 = vmatpush1.msra.mxu0 %v223
        %1567 = vmatprep.subr.mxu0 0.0
        %1568 = vmatpush1.msra.mxu0 %v222
        %1569 = vmatprep.subr.mxu0 0.0
        %1570 = vmatpush1.msra.mxu0 %v221
        %1571 = vmatprep.subr.mxu0 0.0
        %1572 = vmatpush1.msra.mxu0 %v220
        %1573 = vmatprep.subr.mxu0 0.0
        %1574 = vmatpush1.msra.mxu0 %v219
        %1575 = vmatprep.subr.mxu0 0.0
        %1576 = vmatpush1.msra.mxu0 %v218
        %1577 = vmatprep.subr.mxu0 0.0
        %1578 = vmatpush1.msra.mxu0 %v217
        %1579 = vmatprep.subr.mxu0 0.0
        %1580 = vmatpush1.msra.mxu0 %v216
        %1581 = vmatprep.subr.mxu0 0.0
        %1582 = vmatpush1.msra.mxu0 %v215
        %1583 = vmatprep.subr.mxu0 0.0
        %1584 = vmatpush1.msra.mxu0 %v214
        %1585 = vmatprep.subr.mxu0 0.0
        %1586 = vmatpush1.msra.mxu0 %v213
        %1587 = vmatprep.subr.mxu0 0.0
        %1588 = vmatpush1.msra.mxu0 %v212
        %1589 = vmatprep.subr.mxu0 0.0
        %1590 = vmatpush1.msra.mxu0 %v211
        %1591 = vmatprep.subr.mxu0 0.0
        %1592 = vmatpush1.msra.mxu0 %v210
        %1593 = vmatprep.subr.mxu0 0.0
        %1594 = vmatpush1.msra.mxu0 %v209
        %1595 = vmatprep.subr.mxu0 0.0
        %1596 = vmatpush2.msra.mxu0 0.0
        %1597 = vmatprep.subr.mxu0 0.0
        %1598 = vmatpush2.msra.mxu0 0.0
        %1599 = vmatprep.subr.mxu0 0.0
        %1600 = vmatpush2.msra.mxu0 0.0
        %1601 = vmatprep.subr.mxu0 0.0
        %1602 = vmatpush2.msra.mxu0 0.0
        %1603 = vmatprep.subr.mxu0 0.0
        %1604 = vmatpush2.msra.mxu0 0.0
        %1605 = vmatprep.subr.mxu0 0.0
        %1606 = vmatpush2.msra.mxu0 0.0
        %1607 = vmatprep.subr.mxu0 0.0
        %1608 = vmatpush2.msra.mxu0 0.0
        %1609 = vmatprep.subr.mxu0 0.0
        %1610 = vmatpush2.msra.mxu0 0.0
        %1611 = vmatprep.subr.mxu0 0.0
        %1612 = vmatpush2.msra.mxu0 0.0
        %1613 = vmatprep.subr.mxu0 0.0
        %1614 = vmatpush2.msra.mxu0 0.0
        %1615 = vmatprep.subr.mxu0 0.0
        %1616 = vmatpush2.msra.mxu0 0.0
        %1617 = vmatprep.subr.mxu0 0.0
        %1618 = vmatpush2.msra.mxu0 0.0
        %1619 = vmatprep.subr.mxu0 0.0
        %1620 = vmatpush2.msra.mxu0 0.0
        %1621 = vmatprep.subr.mxu0 0.0
        %1622 = vmatpush2.msra.mxu0 0.0
        %1623 = vmatprep.subr.mxu0 0.0
        %1624 = vmatpush2.msra.mxu0 0.0
        %1625 = vmatprep.subr.mxu0 0.0
        %1626 = vmatpush2.msra.mxu0 0.0
        %1627 = vmatprep.mubr.f32.mxu0 0.0
        %1628 = vmatmul.mubr.f32.gmra.mxu0 %v1561
        %v1629 = vpop.f32.mrf.mxu0
        %v1630 = vadd.f32 0.0, %v1629
        %v1631 = vpop.f32.mrf.mxu0
        %1632 = vmatprep.mubr.f32.mxu0 0.0
        %1633 = vmatmul.mubr.f32.gmra.mxu0 %v1562
        %v1634 = vpop.f32.mrf.mxu0
        %v1635 = vadd.f32 0.0, %v1634
        %v1636 = vpop.f32.mrf.mxu0
        %1637 = vdwg.mxu0
        %v1638 = vld [vmem:[#allocation2 + $0x98] sm:$0xff]
        %v1639 = vld [vmem:[#allocation2 + $0xa0] sm:$0xff]
        %1642 = vrot.lane.b32.xlu0 %v1630, 8
        %v1643 = vpop.permute.xlu0 %1642
        %1644 = vrot.lane.b32.xlu0 %v1635, 8
        %v1645 = vpop.permute.xlu0 %1644
        %v1648 = vsel %vm511, %v1553, %v1643
        %v1649 = vsel %vm511, %v1558, %v1645
        %vm1650 = vcmask 130048
        %v1652 = vsel %vm1650, %v1638, 0
        %v1655 = vsel %vm1650, %v1639, 0
        %1657 = vmatprep.subr.mxu0 0.0
        %1658 = vmatpush1.msra.mxu0 0.0
        %1659 = vmatprep.subr.mxu0 0.0
        %1660 = vmatpush1.msra.mxu0 0.0
        %1661 = vmatprep.subr.mxu0 0.0
        %1662 = vmatpush1.msra.mxu0 0.0
        %1663 = vmatprep.subr.mxu0 0.0
        %1664 = vmatpush1.msra.mxu0 0.0
        %1665 = vmatprep.subr.mxu0 0.0
        %1666 = vmatpush1.msra.mxu0 0.0
        %1667 = vmatprep.subr.mxu0 0.0
        %1668 = vmatpush1.msra.mxu0 0.0
        %1669 = vmatprep.subr.mxu0 0.0
        %1670 = vmatpush1.msra.mxu0 0.0
        %1671 = vmatprep.subr.mxu0 0.0
        %1672 = vmatpush1.msra.mxu0 0.0
        %1673 = vmatprep.subr.mxu0 0.0
        %1674 = vmatpush1.msra.mxu0 0.0
        %1675 = vmatprep.subr.mxu0 0.0
        %1676 = vmatpush1.msra.mxu0 0.0
        %1677 = vmatprep.subr.mxu0 0.0
        %1678 = vmatpush1.msra.mxu0 0.0
        %1679 = vmatprep.subr.mxu0 0.0
        %1680 = vmatpush1.msra.mxu0 0.0
        %1681 = vmatprep.subr.mxu0 0.0
        %1682 = vmatpush1.msra.mxu0 0.0
        %1683 = vmatprep.subr.mxu0 0.0
        %1684 = vmatpush1.msra.mxu0 0.0
        %1685 = vmatprep.subr.mxu0 0.0
        %1686 = vmatpush1.msra.mxu0 %v1649
        %1687 = vmatprep.subr.mxu0 0.0
        %1688 = vmatpush1.msra.mxu0 %v1648
        %1689 = vmatprep.subr.mxu0 0.0
        %1690 = vmatpush2.msra.mxu0 0.0
        %1691 = vmatprep.subr.mxu0 0.0
        %1692 = vmatpush2.msra.mxu0 0.0
        %1693 = vmatprep.subr.mxu0 0.0
        %1694 = vmatpush2.msra.mxu0 0.0
        %1695 = vmatprep.subr.mxu0 0.0
        %1696 = vmatpush2.msra.mxu0 0.0
        %1697 = vmatprep.subr.mxu0 0.0
        %1698 = vmatpush2.msra.mxu0 0.0
        %1699 = vmatprep.subr.mxu0 0.0
        %1700 = vmatpush2.msra.mxu0 0.0
        %1701 = vmatprep.subr.mxu0 0.0
        %1702 = vmatpush2.msra.mxu0 0.0
        %1703 = vmatprep.subr.mxu0 0.0
        %1704 = vmatpush2.msra.mxu0 0.0
        %1705 = vmatprep.subr.mxu0 0.0
        %1706 = vmatpush2.msra.mxu0 0.0
        %1707 = vmatprep.subr.mxu0 0.0
        %1708 = vmatpush2.msra.mxu0 0.0
        %1709 = vmatprep.subr.mxu0 0.0
        %1710 = vmatpush2.msra.mxu0 0.0
        %1711 = vmatprep.subr.mxu0 0.0
        %1712 = vmatpush2.msra.mxu0 0.0
        %1713 = vmatprep.subr.mxu0 0.0
        %1714 = vmatpush2.msra.mxu0 0.0
        %1715 = vmatprep.subr.mxu0 0.0
        %1716 = vmatpush2.msra.mxu0 0.0
        %1717 = vmatprep.subr.mxu0 0.0
        %1718 = vmatpush2.msra.mxu0 0.0
        %1719 = vmatprep.subr.mxu0 0.0
        %1720 = vmatpush2.msra.mxu0 0.0
        %1721 = vmatprep.mubr.f32.mxu0 0.0
        %1722 = vmatmul.mubr.f32.gmra.mxu0 %v1652
        %v1723 = vpop.f32.mrf.mxu0
        %v1724 = vadd.f32 0.0, %v1723
        %v1725 = vpop.f32.mrf.mxu0
        %1726 = vmatprep.mubr.f32.mxu0 0.0
        %1727 = vmatmul.mubr.f32.gmra.mxu0 %v1655
        %v1728 = vpop.f32.mrf.mxu0
        %v1729 = vadd.f32 0.0, %v1728
        %v1730 = vpop.f32.mrf.mxu0
        %1731 = vdwg.mxu0
        %v1732 = vmul.f32 %v1724, %v1724
        %v1733 = vmul.f32 %v1729, %v1729
        %1736 = vrot.lane.b32.xlu0 %v1732, 8
        %v1737 = vpop.permute.xlu0 %1736
        %1738 = vrot.lane.b32.xlu0 %v1733, 8
        %v1739 = vpop.permute.xlu0 %1738
        %v1742 = vsub.f32 %v1724, %v1737
        %v1743 = vsub.f32 %v1729, %v1739
        %v1744 = vadd.f32 %v1742, 1e-05
        %v1745 = vadd.f32 %v1743, 1e-05
        %v1746 = vrsqrt.pop %v1744
        %v1747 = vrsqrt.pop %v1745
        %v1748 = vld [vmem:[#allocation2 + $0xd0] sm:$0xff]
        %v1749 = vld [vmem:[#allocation2 + $0xd8] sm:$0xff]
        %1752 = vrot.lane.b32.xlu0 %v1748, 8
        %v1753 = vpop.permute.xlu0 %1752
        %1754 = vrot.lane.b32.xlu0 %v1749, 8
        %v1755 = vpop.permute.xlu0 %1754
        %v1758 = vmul.f32 %v1746, %v1753
        %v1759 = vmul.f32 %v1747, %v1755
        %1762 = vrot.lane.b32.xlu0 %v1758, 120
        %v1763 = vpop.permute.xlu0 %1762
        %1764 = vrot.lane.b32.xlu0 %v1759, 120
        %v1765 = vpop.permute.xlu0 %1764
        %v1768 = vmul.f32 %v1724, %v1763
        %v1769 = vmul.f32 %v1729, %v1765
        %1772 = vrot.lane.b32.xlu0 %v1768, 8
        %v1773 = vpop.permute.xlu0 %1772
        %1774 = vrot.lane.b32.xlu0 %v1769, 8
        %v1775 = vpop.permute.xlu0 %1774
        %v1778 = vsub.f32 %v1748, %v1773
        %v1779 = vsub.f32 %v1749, %v1775
        %1782 = vrot.lane.b32.xlu0 %v1778, 120
        %v1783 = vpop.permute.xlu0 %1782
        %1784 = vrot.lane.b32.xlu0 %v1779, 120
        %v1785 = vpop.permute.xlu0 %1784
        %v1786 = vsel %vm511, %v1763, 0
        %v1788 = vsel %vm511, %v1765, 0
        %v1790 = vsel %vm511, %v1783, 0
        %v1792 = vsel %vm511, %v1785, 0
        %1794 = vmatprep.subr.mxu0 0.0
        %1795 = vmatpush1.msra.mxu0 0.0
        %1796 = vmatprep.subr.mxu0 0.0
        %1797 = vmatpush1.msra.mxu0 0.0
        %1798 = vmatprep.subr.mxu0 0.0
        %1799 = vmatpush1.msra.mxu0 0.0
        %1800 = vmatprep.subr.mxu0 0.0
        %1801 = vmatpush1.msra.mxu0 0.0
        %1802 = vmatprep.subr.mxu0 0.0
        %1803 = vmatpush1.msra.mxu0 0.0
        %1804 = vmatprep.subr.mxu0 0.0
        %1805 = vmatpush1.msra.mxu0 0.0
        %1806 = vmatprep.subr.mxu0 0.0
        %1807 = vmatpush1.msra.mxu0 0.0
        %1808 = vmatprep.subr.mxu0 0.0
        %1809 = vmatpush1.msra.mxu0 0.0
        %1810 = vmatprep.subr.mxu0 0.0
        %1811 = vmatpush1.msra.mxu0 0.0
        %1812 = vmatprep.subr.mxu0 0.0
        %1813 = vmatpush1.msra.mxu0 0.0
        %1814 = vmatprep.subr.mxu0 0.0
        %1815 = vmatpush1.msra.mxu0 0.0
        %1816 = vmatprep.subr.mxu0 0.0
        %1817 = vmatpush1.msra.mxu0 0.0
        %1818 = vmatprep.subr.mxu0 0.0
        %1819 = vmatpush1.msra.mxu0 0.0
        %1820 = vmatprep.subr.mxu0 0.0
        %1821 = vmatpush1.msra.mxu0 0.0
        %1822 = vmatprep.subr.mxu0 0.0
        %1823 = vmatpush1.msra.mxu0 0.0
        %1824 = vmatprep.subr.mxu0 0.0
        %1825 = vmatpush1.msra.mxu0 %v225
        %1826 = vmatprep.subr.mxu0 0.0
        %1827 = vmatpush2.msra.mxu0 0.0
        %1828 = vmatprep.subr.mxu0 0.0
        %1829 = vmatpush2.msra.mxu0 0.0
        %1830 = vmatprep.subr.mxu0 0.0
        %1831 = vmatpush2.msra.mxu0 0.0
        %1832 = vmatprep.subr.mxu0 0.0
        %1833 = vmatpush2.msra.mxu0 0.0
        %1834 = vmatprep.subr.mxu0 0.0
        %1835 = vmatpush2.msra.mxu0 0.0
        %1836 = vmatprep.subr.mxu0 0.0
        %1837 = vmatpush2.msra.mxu0 0.0
        %1838 = vmatprep.subr.mxu0 0.0
        %1839 = vmatpush2.msra.mxu0 0.0
        %1840 = vmatprep.subr.mxu0 0.0
        %1841 = vmatpush2.msra.mxu0 0.0
        %1842 = vmatprep.subr.mxu0 0.0
        %1843 = vmatpush2.msra.mxu0 0.0
        %1844 = vmatprep.subr.mxu0 0.0
        %1845 = vmatpush2.msra.mxu0 0.0
        %1846 = vmatprep.subr.mxu0 0.0
        %1847 = vmatpush2.msra.mxu0 0.0
        %1848 = vmatprep.subr.mxu0 0.0
        %1849 = vmatpush2.msra.mxu0 0.0
        %1850 = vmatprep.subr.mxu0 0.0
        %1851 = vmatpush2.msra.mxu0 0.0
        %1852 = vmatprep.subr.mxu0 0.0
        %1853 = vmatpush2.msra.mxu0 0.0
        %1854 = vmatprep.subr.mxu0 0.0
        %1855 = vmatpush2.msra.mxu0 0.0
        %1856 = vmatprep.subr.mxu0 0.0
        %1857 = vmatpush2.msra.mxu0 0.0
        %1858 = vmatprep.mubr.f32.mxu0 0.0
        %1859 = vmatmul.mubr.f32.gmra.mxu0 %v1786
        %v1860 = vpop.f32.mrf.mxu0
        %v1861 = vadd.f32 0.0, %v1860
        %v1862 = vpop.f32.mrf.mxu0
        %1863 = vmatprep.mubr.f32.mxu0 0.0
        %1864 = vmatmul.mubr.f32.gmra.mxu0 %v1788
        %v1865 = vpop.f32.mrf.mxu0
        %v1866 = vadd.f32 0.0, %v1865
        %v1867 = vpop.f32.mrf.mxu0
        %1868 = vmatprep.mubr.f32.mxu0 0.0
        %1869 = vmatmul.mubr.f32.gmra.mxu0 %v1790
        %v1870 = vpop.f32.mrf.mxu0
        %v1871 = vadd.f32 0.0, %v1870
        %v1872 = vpop.f32.mrf.mxu0
        %1873 = vmatprep.mubr.f32.mxu0 0.0
        %1874 = vmatmul.mubr.f32.gmra.mxu0 %v1792
        %v1875 = vpop.f32.mrf.mxu0
        %v1876 = vadd.f32 0.0, %v1875
        %v1877 = vpop.f32.mrf.mxu0
        %1878 = vdwg.mxu0
        %v1879 = vmul.f32 %v1484, %v1861
        %v1880 = vmul.f32 %v1485, %v1866
        %v1881 = vadd.f32 %v1879, %v1871
        %v1882 = vadd.f32 %v1880, %v1876
        %v1883 = vxor.u32 %v1881, 2147483648
        %v1884 = vxor.u32 %v1882, 2147483648
        %v1885 = vmul.f32 %v1883, 1.442695
        %v1886 = vpow.pop %v1885
        %v1887 = vmul.f32 %v1884, 1.442695
        %v1888 = vpow.pop %v1887
        %v1889 = vadd.f32 %v1886, 1.0
        %v1890 = vadd.f32 %v1888, 1.0
        %v1891 = vrcp.pop %v1889
        %v1892 = vmul.f32 1.0, %v1891
        %v1893 = vrcp.pop %v1890
        %v1894 = vmul.f32 1.0, %v1893
        %v1895 = vmul.f32 %v1881, %v1892
        %v1896 = vmul.f32 %v1882, %v1894
        %1897 = vrot.lane.b32.xlu0 %v1895, 1
        %v1898 = vpop.permute.xlu0 %1897
        %1899 = vrot.lane.b32.xlu0 %v1896, 1
        %v1900 = vpop.permute.xlu0 %1899
        %v1901 = vsel %vm704, 0.0, %v1898
        %v1902 = vsel %vm704, 0.0, %v1900
        %1903 = vrot.lane.b32.xlu0 %v1895, 127
        %v1904 = vpop.permute.xlu0 %1903
        %1905 = vrot.lane.b32.xlu0 %v1896, 127
        %v1906 = vpop.permute.xlu0 %1905
        %v1907 = vsel %vm709, 0.0, %v1904
        %v1908 = vsel %vm709, 0.0, %v1906
        %v1909 = vld [vmem:[#allocation2 + $0x30] sm:$0xff]
        %v1910 = vld [vmem:[#allocation2 + $0x38] sm:$0xff]
        %v1912 = vsel %vm249, %v1909, 0
        %v1915 = vsel %vm249, %v1910, 0
        %1917 = vmatprep.subr.mxu0 0.0
        %1918 = vmatpush1.msra.mxu0 0.0
        %1919 = vmatprep.subr.mxu0 0.0
        %1920 = vmatpush1.msra.mxu0 0.0
        %1921 = vmatprep.subr.mxu0 0.0
        %1922 = vmatpush1.msra.mxu0 0.0
        %1923 = vmatprep.subr.mxu0 0.0
        %1924 = vmatpush1.msra.mxu0 0.0
        %1925 = vmatprep.subr.mxu0 0.0
        %1926 = vmatpush1.msra.mxu0 0.0
        %1927 = vmatprep.subr.mxu0 0.0
        %1928 = vmatpush1.msra.mxu0 0.0
        %1929 = vmatprep.subr.mxu0 0.0
        %1930 = vmatpush1.msra.mxu0 0.0
        %1931 = vmatprep.subr.mxu0 0.0
        %1932 = vmatpush1.msra.mxu0 0.0
        %1933 = vmatprep.subr.mxu0 0.0
        %1934 = vmatpush1.msra.mxu0 0.0
        %1935 = vmatprep.subr.mxu0 0.0
        %1936 = vmatpush1.msra.mxu0 %v226
        %1937 = vmatprep.subr.mxu0 0.0
        %1938 = vmatpush1.msra.mxu0 %v1908
        %1939 = vmatprep.subr.mxu0 0.0
        %1940 = vmatpush1.msra.mxu0 %v1907
        %1941 = vmatprep.subr.mxu0 0.0
        %1942 = vmatpush1.msra.mxu0 %v1896
        %1943 = vmatprep.subr.mxu0 0.0
        %1944 = vmatpush1.msra.mxu0 %v1895
        %1945 = vmatprep.subr.mxu0 0.0
        %1946 = vmatpush1.msra.mxu0 %v1902
        %1947 = vmatprep.subr.mxu0 0.0
        %1948 = vmatpush1.msra.mxu0 %v1901
        %1949 = vmatprep.subr.mxu0 0.0
        %1950 = vmatpush2.msra.mxu0 0.0
        %1951 = vmatprep.subr.mxu0 0.0
        %1952 = vmatpush2.msra.mxu0 0.0
        %1953 = vmatprep.subr.mxu0 0.0
        %1954 = vmatpush2.msra.mxu0 0.0
        %1955 = vmatprep.subr.mxu0 0.0
        %1956 = vmatpush2.msra.mxu0 0.0
        %1957 = vmatprep.subr.mxu0 0.0
        %1958 = vmatpush2.msra.mxu0 0.0
        %1959 = vmatprep.subr.mxu0 0.0
        %1960 = vmatpush2.msra.mxu0 0.0
        %1961 = vmatprep.subr.mxu0 0.0
        %1962 = vmatpush2.msra.mxu0 0.0
        %1963 = vmatprep.subr.mxu0 0.0
        %1964 = vmatpush2.msra.mxu0 0.0
        %1965 = vmatprep.subr.mxu0 0.0
        %1966 = vmatpush2.msra.mxu0 0.0
        %1967 = vmatprep.subr.mxu0 0.0
        %1968 = vmatpush2.msra.mxu0 0.0
        %1969 = vmatprep.subr.mxu0 0.0
        %1970 = vmatpush2.msra.mxu0 0.0
        %1971 = vmatprep.subr.mxu0 0.0
        %1972 = vmatpush2.msra.mxu0 0.0
        %1973 = vmatprep.subr.mxu0 0.0
        %1974 = vmatpush2.msra.mxu0 0.0
        %1975 = vmatprep.subr.mxu0 0.0
        %1976 = vmatpush2.msra.mxu0 0.0
        %1977 = vmatprep.subr.mxu0 0.0
        %1978 = vmatpush2.msra.mxu0 0.0
        %1979 = vmatprep.subr.mxu0 0.0
        %1980 = vmatpush2.msra.mxu0 0.0
        %1981 = vmatprep.mubr.f32.mxu0 0.0
        %1982 = vmatmul.mubr.f32.gmra.mxu0 %v1912
        %v1983 = vpop.f32.mrf.mxu0
        %v1984 = vadd.f32 %v805, %v1983
        %v1985 = vpop.f32.mrf.mxu0
        %1986 = vmatprep.mubr.f32.mxu0 0.0
        %1987 = vmatmul.mubr.f32.gmra.mxu0 %v1915
        %v1988 = vpop.f32.mrf.mxu0
        %v1989 = vadd.f32 %v810, %v1988
        %v1990 = vpop.f32.mrf.mxu0
        %1991 = vdwg.mxu0
        %1992 = vst [vmem:[%s191] sm:$0xff] %v1984
        %1993 = vst [vmem:[%s191 + $0x8] sm:$0xff] %v1989
        %s1994 = sand.u32 %s99, 1
        %s1995 = scalar_lea.sflag [#allocation4], %s1994
        %s1996 = sand.u32 %s99, 1
        %s1997 = smul.addr %s1996, 16
        %s1998 = scalar_lea.vmem [#allocation5], %s1997
        // Predicated region
        $region37: #{resconv_block.1} parent=31 // pred_check
          %p1999 = pneg %p109
        $region38: #{resconv_block.1} parent=31 // pred_check_branch
          %2001 = sbr.rel (%p1999) target = $region40
        $region39: #{resconv_block.1} parent=31 // pred_region
          %s2003 = ssub.s32 256, 256
          %2004 = vsyncadd %s1995, %s2003
          %s2005 = smul.addr %s18, 2
          %s2006 = smul.addr %s2005, 128
          %s2007 = scalar_lea.hbm %s3, %s2006
          %s2008 = sshll.u32 %s1998, 4
          %s2009 = int_to_ptr.vmem [resolvable:$true] %s2008
          %2014 = dma.vmem_to_hbm [thread:$0]  %s2009, 256, %s2007, %s1995, 128, 128, 8
        $region40: #{resconv_block.1} parent=31 // pred_fallthru
          _
      $region32: #{resconv_block.1} parent=5 // pred_fallthru
        _
      %p2015 = scmp.le.s32.totalorder 2, %s13
      // Predicated region
      $region41: #{resconv_block.1} parent=5 // pred_check
        %p2016 = pneg %p2015
      $region42: #{resconv_block.1} parent=5 // pred_check_branch
        %2018 = sbr.rel (%p2016) target = $region44
      $region43: #{resconv_block.1} parent=5 // pred_region
        %s2019 = ssub.s32 %s13, 2
        // Predicated region
        $region45: #{resconv_block.1} parent=43 // pred_check
          %p2020 = pneg %p115
        $region46: #{resconv_block.1} parent=43 // pred_check_branch
          %2022 = sbr.rel (%p2020) target = $region48
        $region47: #{resconv_block.1} parent=43 // pred_region
          %s2023 = sand.u32 %s100, 1
          %s2024 = scalar_lea.sflag [#allocation4], %s2023
          %s2025 = sand.u32 %s100, 1
          %s2026 = smul.addr %s2025, 16
          %s2027 = scalar_lea.vmem [#allocation5], %s2026
          %2028 = dma.done %s2024, 256
        $region48: #{resconv_block.1} parent=43 // pred_fallthru
          _
      $region44: #{resconv_block.1} parent=5 // pred_fallthru
        _
    $region6: #{resconv_block.1} parent=1 // loop_footer
      %s17 = sadd.s32 1, %s13
    $region7: #{resconv_block.1} parent=1 // loop_footer_branch
      %12 = sbr.rel target = $region3
    $region8: #{resconv_block.1} parent=1 // loop_exit
      _
    %2029 = vsyncpa [#allocation3], 1
    %s2030 = scalar_lea.sflag [#allocation3], 1
    %2031 = vsyncpa %s2030, 1
    %2032 = vsyncpa [#allocation4], 1
    %s2033 = scalar_lea.sflag [#allocation4], 1
    %2034 = vsyncpa %s2033, 1

</llo_original>
